<compile_context>
chip_gen: v5e
topology: v5e:2x2
jax: 0.10.0
libtpu: 0.0.40
codegen_flags: <defaults>
</compile_context>

<pallas_src>
import jax
import jax.numpy as jnp
import numpy as np
from jax.experimental import pallas as pl
from jax.experimental.pallas import tpu as pltpu

H = 200   # hidden_dimension from the module
A = 7     # number of aspects (imp_score has shape (1, 7))


def decision_kernel(p_ref, ase1_ref, ase2_ref, ase3_ref,
                    w1_ref, b1_ref, w2_ref, b2_ref,
                    w3_ref, b3_ref, w4_ref, b4_ref, out_ref):
    # p_ref: (A,) f32 in SMEM (softmax already applied in the wrapper).
    # ase*_ref: (A, TB, H) bf16 blocks in VMEM.

    def weighted_sum(ase_ref):
        # Unrolled scaled-add over the leading aspect axis: pure VPU, f32 acc.
        acc = p_ref[0] * ase_ref[0].astype(jnp.float32)
        for a in range(1, A):
            acc = acc + p_ref[a] * ase_ref[a].astype(jnp.float32)
        return acc                                          # (TB, H) f32

    dse1 = weighted_sum(ase1_ref)
    dse2 = weighted_sum(ase2_ref)
    dse3 = weighted_sum(ase3_ref)

    # linear1 on concat((dse1, dse2, dse3), dim=1) as three partial matmuls,
    # fed from ref slices (0/200/400 are sublane-aligned) so the full (600,256)
    # weight never becomes a single live value against the 64-vreg file.
    h = (jnp.dot(dse1, w1_ref[0:H, :], preferred_element_type=jnp.float32)
         + jnp.dot(dse2, w1_ref[H:2 * H, :], preferred_element_type=jnp.float32)
         + jnp.dot(dse3, w1_ref[2 * H:3 * H, :], preferred_element_type=jnp.float32)
         + b1_ref[...])
    h = jnp.maximum(h, 0.0)                                 # relu(linear1(x))

    h = jnp.dot(h, w2_ref[...], preferred_element_type=jnp.float32) + b2_ref[...]
    h = jnp.maximum(h, 0.0)                                 # relu(linear2(x))

    h = jnp.dot(h, w3_ref[...], preferred_element_type=jnp.float32) + b3_ref[...]
    h = jnp.maximum(h, 0.0)                                 # relu(linear3(x))

    h = jnp.dot(h, w4_ref[...], preferred_element_type=jnp.float32) + b4_ref[...]
    h = jnp.maximum(h, 0.0)                                 # relu(linear4(x))

    out_ref[...] = 1.0 / (1.0 + jnp.exp(-h))                # sigmoid


def _round_up(x, m):
    return ((x + m - 1) // m) * m


def decision_forward(imp_score, ase1, ase2, ase3, params, tb=None):
    """Pallas wrapper. ase_i must be (A, B, H); returns decision scores (B, 1)."""
    w1, b1, w2, b2, w3, b3, w4, b4 = params
    assert ase1.shape[0] == A and ase1.shape[2] == H, "ase_i must be (A, B, H)"
    B = ase1.shape[1]

    # bf16 streaming halves HBM traffic on the dominant input. The producer
    # should emit bf16 directly; this cast is a fallback (extra HBM pass).
    if ase1.dtype != jnp.bfloat16:
        ase1, ase2, ase3 = (x.astype(jnp.bfloat16) for x in (ase1, ase2, ase3))

    try:
        vmem_cap = pltpu.get_tpu_info().vmem_capacity_bytes
    except Exception:
        vmem_cap = 64 << 20

    if tb is None:
        tb = 512   # safe, generation-aware tile for v5e / v6e / v7x
        # Ensure >=2 grid steps so ("parallel",) can shard the batch across
        # v7x's two TensorCores (no-op on single-TC v5e/v6e).
        tb = min(tb, max(16, _round_up(-(-B // 2), 16)))
    tb = max(16, min(_round_up(tb, 16), _round_up(B, 16)))

    # Pad B (axis 1) to a multiple of the tile; padded rows sliced off at end.
    Bp = _round_up(B, tb)
    if Bp != B:
        pad = ((0, 0), (0, Bp - B), (0, 0))
        ase1 = jnp.pad(ase1, pad)
        ase2 = jnp.pad(ase2, pad)
        ase3 = jnp.pad(ase3, pad)

    # Grid-invariant softmax hoisted out of the kernel; (A,) f32 lives in SMEM.
    p = jax.nn.softmax(imp_score, axis=1).reshape(A)

    # VMEM estimate with (8,128)-PADDED layout sizes: ase tiles pad H 200->256
    # lanes (bf16), out tile pads 1->128 lanes, weights pad lanes to 128.
    # Everything conservatively counted double-buffered.
    Hp = _round_up(H, 128)
    ase_tile = A * tb * Hp * 2                               # bf16 bytes
    out_tile = tb * 128 * 4
    w_bytes = 4 * (3 * H * 256 + 8 * 256 + 256 * 128 + 8 * 128
                   + 64 * 128 + 8 * 128 + 8 * 128 + 8 * 128)
    est = 2 * (3 * ase_tile + out_tile + w_bytes)
    vmem_limit = int(min(vmem_cap, max(32 << 20, est * 3 // 2)))

    const2 = lambda i: (0, 0)
    ase_spec = pl.BlockSpec((A, tb, H), lambda i: (0, i, 0))

    out = pl.pallas_call(
        decision_kernel,
        out_shape=jax.ShapeDtypeStruct((Bp, 1), jnp.float32),
        grid=(Bp // tb,),
        in_specs=[
            pl.BlockSpec(memory_space=pltpu.MemorySpace.SMEM),  # softmax(imp_score)
            ase_spec, ase_spec, ase_spec,                       # batch-tiled bf16 inputs
            pl.BlockSpec((3 * H, 256), const2), pl.BlockSpec((1, 256), const2),
            pl.BlockSpec((256, 64), const2),    pl.BlockSpec((1, 64), const2),
            pl.BlockSpec((64, 8), const2),      pl.BlockSpec((1, 8), const2),
            pl.BlockSpec((8, 1), const2),       pl.BlockSpec((1, 1), const2),
        ],
        out_specs=pl.BlockSpec((tb, 1), lambda i: (i, 0)),
        compiler_params=pltpu.CompilerParams(
            dimension_semantics=("parallel",),
            vmem_limit_bytes=vmem_limit),
    )(p, ase1, ase2, ase3, w1, b1, w2, b2, w3, b3, w4, b4)

    return out[:B]


def reference_forward(imp_score, ase1, ase2, ase3, params):
    """Pure-JAX reference mirroring the PyTorch forward (eval mode: dropout is
    identity). ase_i here are in PyTorch layout (B, A, H), float32."""
    w1, b1, w2, b2, w3, b3, w4, b4 = params
    p = jax.nn.softmax(imp_score, axis=1)[:, None, :]        # (1, 1, A)
    dse1 = jnp.matmul(p, ase1).squeeze(1)                    # (B, H)
    dse2 = jnp.matmul(p, ase2).squeeze(1)
    dse3 = jnp.matmul(p, ase3).squeeze(1)
    x = jnp.concatenate([dse1, dse2, dse3], axis=1)          # (B, 3H)
    x = jax.nn.relu(x @ w1 + b1)
    x = jax.nn.relu(x @ w2 + b2)
    x = jax.nn.relu(x @ w3 + b3)
    x = jax.nn.relu(x @ w4 + b4)
    return jax.nn.sigmoid(x)


def xavier_normal(key, shape):
    fan_in, fan_out = shape
    std = float(np.sqrt(2.0 / (fan_in + fan_out)))
    return jax.random.normal(key, shape, dtype=jnp.float32) * std


if __name__ == "__main__":
    key = jax.random.PRNGKey(0)
    B = 19   # deliberately not a multiple of the tile to exercise padding

    keys = jax.random.split(key, 12)

    # Parameter init (shapes from DecsionModel.__init__); weights stored
    # transposed as (in, out): linear1 600->256, 256->64, 64->8, 8->1.
    w1 = xavier_normal(keys[0], (3 * H, 256)); b1 = jnp.zeros((1, 256), jnp.float32)
    w2 = xavier_normal(keys[1], (256, 64));    b2 = jnp.zeros((1, 64), jnp.float32)
    w3 = xavier_normal(keys[2], (64, 8));      b3 = jnp.zeros((1, 8), jnp.float32)
    w4 = xavier_normal(keys[3], (8, 1));       b4 = jnp.zeros((1, 1), jnp.float32)
    params = (w1, b1, w2, b2, w3, b3, w4, b4)

    # imp_score: (1, 7), xavier_normal_ init
    imp_score = xavier_normal(keys[4], (1, A))

    # Synthetic aspect-model outputs, emitted producer-side in the kernel's
    # preferred (A, B, H) bf16 layout/dtype.
    ase1 = jax.random.normal(keys[5], (A, B, H), dtype=jnp.float32).astype(jnp.bfloat16)
    ase2 = jax.random.normal(keys[6], (A, B, H), dtype=jnp.float32).astype(jnp.bfloat16)
    ase3 = jax.random.normal(keys[7], (A, B, H), dtype=jnp.float32).astype(jnp.bfloat16)

    # Auto tile selection gives tb=16 here -> 2 grid steps, exercising the
    # batch-tiled grid, weight residency across steps, and ragged-B padding.
    out = decision_forward(imp_score, ase1, ase2, ase3, params)
    out = jax.block_until_ready(out)

    # Reference consumes the exact same bf16-rounded values (upcast to f32,
    # PyTorch (B, A, H) layout) so only compute-path ordering differs.
    to_ref = lambda x: jnp.transpose(x, (1, 0, 2)).astype(jnp.float32)
    ref = reference_forward(imp_score, to_ref(ase1), to_ref(ase2), to_ref(ase3), params)
    np.testing.assert_allclose(np.asarray(out), np.asarray(ref), rtol=1e-4, atol=1e-5)

    print("KERNEL_OK")
</pallas_src>

<mosaic_0001>
module attributes {stable_mosaic.version = 11 : i64} {
  func.func @decision_kernel(%arg0: i32, %arg1: memref<7xf32, #tpu.memory_space<smem>>, %arg2: memref<7x16x200xbf16, #tpu.memory_space<vmem>>, %arg3: memref<7x16x200xbf16, #tpu.memory_space<vmem>>, %arg4: memref<7x16x200xbf16, #tpu.memory_space<vmem>>, %arg5: memref<600x256xf32, #tpu.memory_space<vmem>>, %arg6: memref<1x256xf32, #tpu.memory_space<vmem>>, %arg7: memref<256x64xf32, #tpu.memory_space<vmem>>, %arg8: memref<1x64xf32, #tpu.memory_space<vmem>>, %arg9: memref<64x8xf32, #tpu.memory_space<vmem>>, %arg10: memref<1x8xf32, #tpu.memory_space<vmem>>, %arg11: memref<8x1xf32, #tpu.memory_space<vmem>>, %arg12: memref<1x1xf32, #tpu.memory_space<vmem>>, %arg13: memref<16x1xf32, #tpu.memory_space<vmem>>) attributes {dimension_semantics = [#tpu.dimension_semantics<parallel>], iteration_bounds = array<i64: 2>, scalar_prefetch = 0 : i64, scratch_operands = 0 : i64, tpu.core_type = #tpu.core_type<tc>, window_params = [{transform_indices = @transform_0, window_bounds = array<i64: 7>}, {transform_indices = @transform_1, window_bounds = array<i64: 7, 16, 200>}, {transform_indices = @transform_2, window_bounds = array<i64: 7, 16, 200>}, {transform_indices = @transform_3, window_bounds = array<i64: 7, 16, 200>}, {pipeline_mode = #tpu.pipeline_mode<synchronous>, transform_indices = @transform_4, window_bounds = array<i64: 600, 256>}, {pipeline_mode = #tpu.pipeline_mode<synchronous>, transform_indices = @transform_5, window_bounds = array<i64: 1, 256>}, {pipeline_mode = #tpu.pipeline_mode<synchronous>, transform_indices = @transform_6, window_bounds = array<i64: 256, 64>}, {pipeline_mode = #tpu.pipeline_mode<synchronous>, transform_indices = @transform_7, window_bounds = array<i64: 1, 64>}, {pipeline_mode = #tpu.pipeline_mode<synchronous>, transform_indices = @transform_8, window_bounds = array<i64: 64, 8>}, {pipeline_mode = #tpu.pipeline_mode<synchronous>, transform_indices = @transform_9, window_bounds = array<i64: 1, 8>}, {pipeline_mode = #tpu.pipeline_mode<synchronous>, transform_indices = @transform_10, window_bounds = array<i64: 8, 1>}, {pipeline_mode = #tpu.pipeline_mode<synchronous>, transform_indices = @transform_11, window_bounds = array<i64: 1, 1>}, {transform_indices = @transform_12, window_bounds = array<i64: 16, 1>}]} {
    %c0 = arith.constant 0 : index
    %0 = memref.load %arg1[%c0] : memref<7xf32, #tpu.memory_space<smem>>
    %c0_0 = arith.constant 0 : index
    %c0_1 = arith.constant 0 : index
    %c0_2 = arith.constant 0 : index
    %1 = vector.load %arg2[%c0_0, %c0_1, %c0_2] : memref<7x16x200xbf16, #tpu.memory_space<vmem>>, vector<1x16x200xbf16>
    %2 = vector.shape_cast %1 : vector<1x16x200xbf16> to vector<16x200xbf16>
    %3 = arith.extf %2 : vector<16x200xbf16> to vector<16x200xf32>
    %4 = vector.broadcast %0 : f32 to vector<16x200xf32>
    %5 = arith.mulf %4, %3 : vector<16x200xf32>
    %c1 = arith.constant 1 : index
    %6 = memref.load %arg1[%c1] : memref<7xf32, #tpu.memory_space<smem>>
    %c1_3 = arith.constant 1 : index
    %c0_4 = arith.constant 0 : index
    %c0_5 = arith.constant 0 : index
    %7 = vector.load %arg2[%c1_3, %c0_4, %c0_5] : memref<7x16x200xbf16, #tpu.memory_space<vmem>>, vector<1x16x200xbf16>
    %8 = vector.shape_cast %7 : vector<1x16x200xbf16> to vector<16x200xbf16>
    %9 = arith.extf %8 : vector<16x200xbf16> to vector<16x200xf32>
    %10 = vector.broadcast %6 : f32 to vector<16x200xf32>
    %11 = arith.mulf %10, %9 : vector<16x200xf32>
    %12 = arith.addf %5, %11 : vector<16x200xf32>
    %c2 = arith.constant 2 : index
    %13 = memref.load %arg1[%c2] : memref<7xf32, #tpu.memory_space<smem>>
    %c2_6 = arith.constant 2 : index
    %c0_7 = arith.constant 0 : index
    %c0_8 = arith.constant 0 : index
    %14 = vector.load %arg2[%c2_6, %c0_7, %c0_8] : memref<7x16x200xbf16, #tpu.memory_space<vmem>>, vector<1x16x200xbf16>
    %15 = vector.shape_cast %14 : vector<1x16x200xbf16> to vector<16x200xbf16>
    %16 = arith.extf %15 : vector<16x200xbf16> to vector<16x200xf32>
    %17 = vector.broadcast %13 : f32 to vector<16x200xf32>
    %18 = arith.mulf %17, %16 : vector<16x200xf32>
    %19 = arith.addf %12, %18 : vector<16x200xf32>
    %c3 = arith.constant 3 : index
    %20 = memref.load %arg1[%c3] : memref<7xf32, #tpu.memory_space<smem>>
    %c3_9 = arith.constant 3 : index
    %c0_10 = arith.constant 0 : index
    %c0_11 = arith.constant 0 : index
    %21 = vector.load %arg2[%c3_9, %c0_10, %c0_11] : memref<7x16x200xbf16, #tpu.memory_space<vmem>>, vector<1x16x200xbf16>
    %22 = vector.shape_cast %21 : vector<1x16x200xbf16> to vector<16x200xbf16>
    %23 = arith.extf %22 : vector<16x200xbf16> to vector<16x200xf32>
    %24 = vector.broadcast %20 : f32 to vector<16x200xf32>
    %25 = arith.mulf %24, %23 : vector<16x200xf32>
    %26 = arith.addf %19, %25 : vector<16x200xf32>
    %c4 = arith.constant 4 : index
    %27 = memref.load %arg1[%c4] : memref<7xf32, #tpu.memory_space<smem>>
    %c4_12 = arith.constant 4 : index
    %c0_13 = arith.constant 0 : index
    %c0_14 = arith.constant 0 : index
    %28 = vector.load %arg2[%c4_12, %c0_13, %c0_14] : memref<7x16x200xbf16, #tpu.memory_space<vmem>>, vector<1x16x200xbf16>
    %29 = vector.shape_cast %28 : vector<1x16x200xbf16> to vector<16x200xbf16>
    %30 = arith.extf %29 : vector<16x200xbf16> to vector<16x200xf32>
    %31 = vector.broadcast %27 : f32 to vector<16x200xf32>
    %32 = arith.mulf %31, %30 : vector<16x200xf32>
    %33 = arith.addf %26, %32 : vector<16x200xf32>
    %c5 = arith.constant 5 : index
    %34 = memref.load %arg1[%c5] : memref<7xf32, #tpu.memory_space<smem>>
    %c5_15 = arith.constant 5 : index
    %c0_16 = arith.constant 0 : index
    %c0_17 = arith.constant 0 : index
    %35 = vector.load %arg2[%c5_15, %c0_16, %c0_17] : memref<7x16x200xbf16, #tpu.memory_space<vmem>>, vector<1x16x200xbf16>
    %36 = vector.shape_cast %35 : vector<1x16x200xbf16> to vector<16x200xbf16>
    %37 = arith.extf %36 : vector<16x200xbf16> to vector<16x200xf32>
    %38 = vector.broadcast %34 : f32 to vector<16x200xf32>
    %39 = arith.mulf %38, %37 : vector<16x200xf32>
    %40 = arith.addf %33, %39 : vector<16x200xf32>
    %c6 = arith.constant 6 : index
    %41 = memref.load %arg1[%c6] : memref<7xf32, #tpu.memory_space<smem>>
    %c6_18 = arith.constant 6 : index
    %c0_19 = arith.constant 0 : index
    %c0_20 = arith.constant 0 : index
    %42 = vector.load %arg2[%c6_18, %c0_19, %c0_20] : memref<7x16x200xbf16, #tpu.memory_space<vmem>>, vector<1x16x200xbf16>
    %43 = vector.shape_cast %42 : vector<1x16x200xbf16> to vector<16x200xbf16>
    %44 = arith.extf %43 : vector<16x200xbf16> to vector<16x200xf32>
    %45 = vector.broadcast %41 : f32 to vector<16x200xf32>
    %46 = arith.mulf %45, %44 : vector<16x200xf32>
    %47 = arith.addf %40, %46 : vector<16x200xf32>
    %c0_21 = arith.constant 0 : index
    %48 = memref.load %arg1[%c0_21] : memref<7xf32, #tpu.memory_space<smem>>
    %c0_22 = arith.constant 0 : index
    %c0_23 = arith.constant 0 : index
    %c0_24 = arith.constant 0 : index
    %49 = vector.load %arg3[%c0_22, %c0_23, %c0_24] : memref<7x16x200xbf16, #tpu.memory_space<vmem>>, vector<1x16x200xbf16>
    %50 = vector.shape_cast %49 : vector<1x16x200xbf16> to vector<16x200xbf16>
    %51 = arith.extf %50 : vector<16x200xbf16> to vector<16x200xf32>
    %52 = vector.broadcast %48 : f32 to vector<16x200xf32>
    %53 = arith.mulf %52, %51 : vector<16x200xf32>
    %c1_25 = arith.constant 1 : index
    %54 = memref.load %arg1[%c1_25] : memref<7xf32, #tpu.memory_space<smem>>
    %c1_26 = arith.constant 1 : index
    %c0_27 = arith.constant 0 : index
    %c0_28 = arith.constant 0 : index
    %55 = vector.load %arg3[%c1_26, %c0_27, %c0_28] : memref<7x16x200xbf16, #tpu.memory_space<vmem>>, vector<1x16x200xbf16>
    %56 = vector.shape_cast %55 : vector<1x16x200xbf16> to vector<16x200xbf16>
    %57 = arith.extf %56 : vector<16x200xbf16> to vector<16x200xf32>
    %58 = vector.broadcast %54 : f32 to vector<16x200xf32>
    %59 = arith.mulf %58, %57 : vector<16x200xf32>
    %60 = arith.addf %53, %59 : vector<16x200xf32>
    %c2_29 = arith.constant 2 : index
    %61 = memref.load %arg1[%c2_29] : memref<7xf32, #tpu.memory_space<smem>>
    %c2_30 = arith.constant 2 : index
    %c0_31 = arith.constant 0 : index
    %c0_32 = arith.constant 0 : index
    %62 = vector.load %arg3[%c2_30, %c0_31, %c0_32] : memref<7x16x200xbf16, #tpu.memory_space<vmem>>, vector<1x16x200xbf16>
    %63 = vector.shape_cast %62 : vector<1x16x200xbf16> to vector<16x200xbf16>
    %64 = arith.extf %63 : vector<16x200xbf16> to vector<16x200xf32>
    %65 = vector.broadcast %61 : f32 to vector<16x200xf32>
    %66 = arith.mulf %65, %64 : vector<16x200xf32>
    %67 = arith.addf %60, %66 : vector<16x200xf32>
    %c3_33 = arith.constant 3 : index
    %68 = memref.load %arg1[%c3_33] : memref<7xf32, #tpu.memory_space<smem>>
    %c3_34 = arith.constant 3 : index
    %c0_35 = arith.constant 0 : index
    %c0_36 = arith.constant 0 : index
    %69 = vector.load %arg3[%c3_34, %c0_35, %c0_36] : memref<7x16x200xbf16, #tpu.memory_space<vmem>>, vector<1x16x200xbf16>
    %70 = vector.shape_cast %69 : vector<1x16x200xbf16> to vector<16x200xbf16>
    %71 = arith.extf %70 : vector<16x200xbf16> to vector<16x200xf32>
    %72 = vector.broadcast %68 : f32 to vector<16x200xf32>
    %73 = arith.mulf %72, %71 : vector<16x200xf32>
    %74 = arith.addf %67, %73 : vector<16x200xf32>
    %c4_37 = arith.constant 4 : index
    %75 = memref.load %arg1[%c4_37] : memref<7xf32, #tpu.memory_space<smem>>
    %c4_38 = arith.constant 4 : index
    %c0_39 = arith.constant 0 : index
    %c0_40 = arith.constant 0 : index
    %76 = vector.load %arg3[%c4_38, %c0_39, %c0_40] : memref<7x16x200xbf16, #tpu.memory_space<vmem>>, vector<1x16x200xbf16>
    %77 = vector.shape_cast %76 : vector<1x16x200xbf16> to vector<16x200xbf16>
    %78 = arith.extf %77 : vector<16x200xbf16> to vector<16x200xf32>
    %79 = vector.broadcast %75 : f32 to vector<16x200xf32>
    %80 = arith.mulf %79, %78 : vector<16x200xf32>
    %81 = arith.addf %74, %80 : vector<16x200xf32>
    %c5_41 = arith.constant 5 : index
    %82 = memref.load %arg1[%c5_41] : memref<7xf32, #tpu.memory_space<smem>>
    %c5_42 = arith.constant 5 : index
    %c0_43 = arith.constant 0 : index
    %c0_44 = arith.constant 0 : index
    %83 = vector.load %arg3[%c5_42, %c0_43, %c0_44] : memref<7x16x200xbf16, #tpu.memory_space<vmem>>, vector<1x16x200xbf16>
    %84 = vector.shape_cast %83 : vector<1x16x200xbf16> to vector<16x200xbf16>
    %85 = arith.extf %84 : vector<16x200xbf16> to vector<16x200xf32>
    %86 = vector.broadcast %82 : f32 to vector<16x200xf32>
    %87 = arith.mulf %86, %85 : vector<16x200xf32>
    %88 = arith.addf %81, %87 : vector<16x200xf32>
    %c6_45 = arith.constant 6 : index
    %89 = memref.load %arg1[%c6_45] : memref<7xf32, #tpu.memory_space<smem>>
    %c6_46 = arith.constant 6 : index
    %c0_47 = arith.constant 0 : index
    %c0_48 = arith.constant 0 : index
    %90 = vector.load %arg3[%c6_46, %c0_47, %c0_48] : memref<7x16x200xbf16, #tpu.memory_space<vmem>>, vector<1x16x200xbf16>
    %91 = vector.shape_cast %90 : vector<1x16x200xbf16> to vector<16x200xbf16>
    %92 = arith.extf %91 : vector<16x200xbf16> to vector<16x200xf32>
    %93 = vector.broadcast %89 : f32 to vector<16x200xf32>
    %94 = arith.mulf %93, %92 : vector<16x200xf32>
    %95 = arith.addf %88, %94 : vector<16x200xf32>
    %c0_49 = arith.constant 0 : index
    %96 = memref.load %arg1[%c0_49] : memref<7xf32, #tpu.memory_space<smem>>
    %c0_50 = arith.constant 0 : index
    %c0_51 = arith.constant 0 : index
    %c0_52 = arith.constant 0 : index
    %97 = vector.load %arg4[%c0_50, %c0_51, %c0_52] : memref<7x16x200xbf16, #tpu.memory_space<vmem>>, vector<1x16x200xbf16>
    %98 = vector.shape_cast %97 : vector<1x16x200xbf16> to vector<16x200xbf16>
    %99 = arith.extf %98 : vector<16x200xbf16> to vector<16x200xf32>
    %100 = vector.broadcast %96 : f32 to vector<16x200xf32>
    %101 = arith.mulf %100, %99 : vector<16x200xf32>
    %c1_53 = arith.constant 1 : index
    %102 = memref.load %arg1[%c1_53] : memref<7xf32, #tpu.memory_space<smem>>
    %c1_54 = arith.constant 1 : index
    %c0_55 = arith.constant 0 : index
    %c0_56 = arith.constant 0 : index
    %103 = vector.load %arg4[%c1_54, %c0_55, %c0_56] : memref<7x16x200xbf16, #tpu.memory_space<vmem>>, vector<1x16x200xbf16>
    %104 = vector.shape_cast %103 : vector<1x16x200xbf16> to vector<16x200xbf16>
    %105 = arith.extf %104 : vector<16x200xbf16> to vector<16x200xf32>
    %106 = vector.broadcast %102 : f32 to vector<16x200xf32>
    %107 = arith.mulf %106, %105 : vector<16x200xf32>
    %108 = arith.addf %101, %107 : vector<16x200xf32>
    %c2_57 = arith.constant 2 : index
    %109 = memref.load %arg1[%c2_57] : memref<7xf32, #tpu.memory_space<smem>>
    %c2_58 = arith.constant 2 : index
    %c0_59 = arith.constant 0 : index
    %c0_60 = arith.constant 0 : index
    %110 = vector.load %arg4[%c2_58, %c0_59, %c0_60] : memref<7x16x200xbf16, #tpu.memory_space<vmem>>, vector<1x16x200xbf16>
    %111 = vector.shape_cast %110 : vector<1x16x200xbf16> to vector<16x200xbf16>
    %112 = arith.extf %111 : vector<16x200xbf16> to vector<16x200xf32>
    %113 = vector.broadcast %109 : f32 to vector<16x200xf32>
    %114 = arith.mulf %113, %112 : vector<16x200xf32>
    %115 = arith.addf %108, %114 : vector<16x200xf32>
    %c3_61 = arith.constant 3 : index
    %116 = memref.load %arg1[%c3_61] : memref<7xf32, #tpu.memory_space<smem>>
    %c3_62 = arith.constant 3 : index
    %c0_63 = arith.constant 0 : index
    %c0_64 = arith.constant 0 : index
    %117 = vector.load %arg4[%c3_62, %c0_63, %c0_64] : memref<7x16x200xbf16, #tpu.memory_space<vmem>>, vector<1x16x200xbf16>
    %118 = vector.shape_cast %117 : vector<1x16x200xbf16> to vector<16x200xbf16>
    %119 = arith.extf %118 : vector<16x200xbf16> to vector<16x200xf32>
    %120 = vector.broadcast %116 : f32 to vector<16x200xf32>
    %121 = arith.mulf %120, %119 : vector<16x200xf32>
    %122 = arith.addf %115, %121 : vector<16x200xf32>
    %c4_65 = arith.constant 4 : index
    %123 = memref.load %arg1[%c4_65] : memref<7xf32, #tpu.memory_space<smem>>
    %c4_66 = arith.constant 4 : index
    %c0_67 = arith.constant 0 : index
    %c0_68 = arith.constant 0 : index
    %124 = vector.load %arg4[%c4_66, %c0_67, %c0_68] : memref<7x16x200xbf16, #tpu.memory_space<vmem>>, vector<1x16x200xbf16>
    %125 = vector.shape_cast %124 : vector<1x16x200xbf16> to vector<16x200xbf16>
    %126 = arith.extf %125 : vector<16x200xbf16> to vector<16x200xf32>
    %127 = vector.broadcast %123 : f32 to vector<16x200xf32>
    %128 = arith.mulf %127, %126 : vector<16x200xf32>
    %129 = arith.addf %122, %128 : vector<16x200xf32>
    %c5_69 = arith.constant 5 : index
    %130 = memref.load %arg1[%c5_69] : memref<7xf32, #tpu.memory_space<smem>>
    %c5_70 = arith.constant 5 : index
    %c0_71 = arith.constant 0 : index
    %c0_72 = arith.constant 0 : index
    %131 = vector.load %arg4[%c5_70, %c0_71, %c0_72] : memref<7x16x200xbf16, #tpu.memory_space<vmem>>, vector<1x16x200xbf16>
    %132 = vector.shape_cast %131 : vector<1x16x200xbf16> to vector<16x200xbf16>
    %133 = arith.extf %132 : vector<16x200xbf16> to vector<16x200xf32>
    %134 = vector.broadcast %130 : f32 to vector<16x200xf32>
    %135 = arith.mulf %134, %133 : vector<16x200xf32>
    %136 = arith.addf %129, %135 : vector<16x200xf32>
    %c6_73 = arith.constant 6 : index
    %137 = memref.load %arg1[%c6_73] : memref<7xf32, #tpu.memory_space<smem>>
    %c6_74 = arith.constant 6 : index
    %c0_75 = arith.constant 0 : index
    %c0_76 = arith.constant 0 : index
    %138 = vector.load %arg4[%c6_74, %c0_75, %c0_76] : memref<7x16x200xbf16, #tpu.memory_space<vmem>>, vector<1x16x200xbf16>
    %139 = vector.shape_cast %138 : vector<1x16x200xbf16> to vector<16x200xbf16>
    %140 = arith.extf %139 : vector<16x200xbf16> to vector<16x200xf32>
    %141 = vector.broadcast %137 : f32 to vector<16x200xf32>
    %142 = arith.mulf %141, %140 : vector<16x200xf32>
    %143 = arith.addf %136, %142 : vector<16x200xf32>
    %c0_77 = arith.constant 0 : index
    %c0_78 = arith.constant 0 : index
    %144 = vector.load %arg5[%c0_77, %c0_78] : memref<600x256xf32, #tpu.memory_space<vmem>>, vector<200x256xf32>
    %cst = arith.constant dense<0.000000e+00> : vector<16x256xf32>
    %145 = tpu.matmul %47, %144, %cst {dimension_numbers = #tpu.dot_dimension_numbers<[1], [0], [0], [1], [0, 0, 1, 1], [], []>} : vector<16x200xf32>, vector<200x256xf32>, vector<16x256xf32> -> vector<16x256xf32>
    %c200 = arith.constant 200 : index
    %c0_79 = arith.constant 0 : index
    %146 = vector.load %arg5[%c200, %c0_79] : memref<600x256xf32, #tpu.memory_space<vmem>>, vector<200x256xf32>
    %cst_80 = arith.constant dense<0.000000e+00> : vector<16x256xf32>
    %147 = tpu.matmul %95, %146, %cst_80 {dimension_numbers = #tpu.dot_dimension_numbers<[1], [0], [0], [1], [0, 0, 1, 1], [], []>} : vector<16x200xf32>, vector<200x256xf32>, vector<16x256xf32> -> vector<16x256xf32>
    %148 = arith.addf %145, %147 : vector<16x256xf32>
    %c400 = arith.constant 400 : index
    %c0_81 = arith.constant 0 : index
    %149 = vector.load %arg5[%c400, %c0_81] : memref<600x256xf32, #tpu.memory_space<vmem>>, vector<200x256xf32>
    %cst_82 = arith.constant dense<0.000000e+00> : vector<16x256xf32>
    %150 = tpu.matmul %143, %149, %cst_82 {dimension_numbers = #tpu.dot_dimension_numbers<[1], [0], [0], [1], [0, 0, 1, 1], [], []>} : vector<16x200xf32>, vector<200x256xf32>, vector<16x256xf32> -> vector<16x256xf32>
    %151 = arith.addf %148, %150 : vector<16x256xf32>
    %c0_83 = arith.constant 0 : index
    %c0_84 = arith.constant 0 : index
    %152 = vector.load %arg6[%c0_83, %c0_84] : memref<1x256xf32, #tpu.memory_space<vmem>>, vector<1x256xf32>
    %153 = vector.broadcast %152 : vector<1x256xf32> to vector<16x256xf32>
    %154 = arith.addf %151, %153 : vector<16x256xf32>
    %cst_85 = arith.constant 0.000000e+00 : f32
    %155 = vector.broadcast %cst_85 : f32 to vector<16x256xf32>
    %156 = arith.maximumf %154, %155 : vector<16x256xf32>
    %c0_86 = arith.constant 0 : index
    %c0_87 = arith.constant 0 : index
    %157 = vector.load %arg7[%c0_86, %c0_87] : memref<256x64xf32, #tpu.memory_space<vmem>>, vector<256x64xf32>
    %cst_88 = arith.constant dense<0.000000e+00> : vector<16x64xf32>
    %158 = tpu.matmul %156, %157, %cst_88 {dimension_numbers = #tpu.dot_dimension_numbers<[1], [0], [0], [1], [0, 0, 1, 1], [], []>} : vector<16x256xf32>, vector<256x64xf32>, vector<16x64xf32> -> vector<16x64xf32>
    %c0_89 = arith.constant 0 : index
    %c0_90 = arith.constant 0 : index
    %159 = vector.load %arg8[%c0_89, %c0_90] : memref<1x64xf32, #tpu.memory_space<vmem>>, vector<1x64xf32>
    %160 = vector.broadcast %159 : vector<1x64xf32> to vector<16x64xf32>
    %161 = arith.addf %158, %160 : vector<16x64xf32>
    %cst_91 = arith.constant 0.000000e+00 : f32
    %162 = vector.broadcast %cst_91 : f32 to vector<16x64xf32>
    %163 = arith.maximumf %161, %162 : vector<16x64xf32>
    %c0_92 = arith.constant 0 : index
    %c0_93 = arith.constant 0 : index
    %164 = vector.load %arg9[%c0_92, %c0_93] : memref<64x8xf32, #tpu.memory_space<vmem>>, vector<64x8xf32>
    %cst_94 = arith.constant dense<0.000000e+00> : vector<16x8xf32>
    %165 = tpu.matmul %163, %164, %cst_94 {dimension_numbers = #tpu.dot_dimension_numbers<[1], [0], [0], [1], [0, 0, 1, 1], [], []>} : vector<16x64xf32>, vector<64x8xf32>, vector<16x8xf32> -> vector<16x8xf32>
    %c0_95 = arith.constant 0 : index
    %c0_96 = arith.constant 0 : index
    %166 = vector.load %arg10[%c0_95, %c0_96] : memref<1x8xf32, #tpu.memory_space<vmem>>, vector<1x8xf32>
    %167 = vector.broadcast %166 : vector<1x8xf32> to vector<16x8xf32>
    %168 = arith.addf %165, %167 : vector<16x8xf32>
    %cst_97 = arith.constant 0.000000e+00 : f32
    %169 = vector.broadcast %cst_97 : f32 to vector<16x8xf32>
    %170 = arith.maximumf %168, %169 : vector<16x8xf32>
    %c0_98 = arith.constant 0 : index
    %c0_99 = arith.constant 0 : index
    %171 = vector.load %arg11[%c0_98, %c0_99] : memref<8x1xf32, #tpu.memory_space<vmem>>, vector<8x1xf32>
    %cst_100 = arith.constant dense<0.000000e+00> : vector<16x1xf32>
    %172 = tpu.matmul %170, %171, %cst_100 {dimension_numbers = #tpu.dot_dimension_numbers<[1], [0], [0], [1], [0, 0, 1, 1], [], []>} : vector<16x8xf32>, vector<8x1xf32>, vector<16x1xf32> -> vector<16x1xf32>
    %c0_101 = arith.constant 0 : index
    %c0_102 = arith.constant 0 : index
    %173 = vector.load %arg12[%c0_101, %c0_102] : memref<1x1xf32, #tpu.memory_space<vmem>>, vector<1x1xf32>
    %174 = vector.broadcast %173 : vector<1x1xf32> to vector<16x1xf32>
    %175 = arith.addf %172, %174 : vector<16x1xf32>
    %cst_103 = arith.constant 0.000000e+00 : f32
    %176 = vector.broadcast %cst_103 : f32 to vector<16x1xf32>
    %177 = arith.maximumf %175, %176 : vector<16x1xf32>
    %cst_104 = arith.constant 0.000000e+00 : f32
    %178 = vector.broadcast %cst_104 : f32 to vector<16x1xf32>
    %179 = arith.subf %178, %177 : vector<16x1xf32>
    %180 = math.exp %179 : vector<16x1xf32>
    %cst_105 = arith.constant 1.000000e+00 : f32
    %181 = vector.broadcast %cst_105 : f32 to vector<16x1xf32>
    %182 = arith.addf %181, %180 : vector<16x1xf32>
    %cst_106 = arith.constant 1.000000e+00 : f32
    %183 = vector.broadcast %cst_106 : f32 to vector<16x1xf32>
    %184 = arith.divf %183, %182 : vector<16x1xf32>
    %c0_107 = arith.constant 0 : index
    %c0_108 = arith.constant 0 : index
    %185 = vector.load %arg13[%c0_107, %c0_108] : memref<16x1xf32, #tpu.memory_space<vmem>>, vector<16x1xf32>
    tpu.vector_store %arg13[%c0_107, %c0_108], %184 {strides = array<i32>} : memref<16x1xf32, #tpu.memory_space<vmem>>, vector<16x1xf32>,
    return
  }
  func.func @transform_0(%arg0: i32) -> i32 {
    %c0_i32 = arith.constant 0 : i32
    %c0_i32_0 = arith.constant 0 : i32
    return %c0_i32 : i32
  }
  func.func @transform_1(%arg0: i32) -> (i32, i32, i32) {
    %c0_i32 = arith.constant 0 : i32
    %c0_i32_0 = arith.constant 0 : i32
    %c0_i32_1 = arith.constant 0 : i32
    return %c0_i32, %arg0, %c0_i32_0 : i32, i32, i32
  }
  func.func @transform_2(%arg0: i32) -> (i32, i32, i32) {
    %c0_i32 = arith.constant 0 : i32
    %c0_i32_0 = arith.constant 0 : i32
    %c0_i32_1 = arith.constant 0 : i32
    return %c0_i32, %arg0, %c0_i32_0 : i32, i32, i32
  }
  func.func @transform_3(%arg0: i32) -> (i32, i32, i32) {
    %c0_i32 = arith.constant 0 : i32
    %c0_i32_0 = arith.constant 0 : i32
    %c0_i32_1 = arith.constant 0 : i32
    return %c0_i32, %arg0, %c0_i32_0 : i32, i32, i32
  }
  func.func @transform_4(%arg0: i32) -> (i32, i32) {
    %c0_i32 = arith.constant 0 : i32
    %c0_i32_0 = arith.constant 0 : i32
    %c0_i32_1 = arith.constant 0 : i32
    return %c0_i32, %c0_i32_0 : i32, i32
  }
  func.func @transform_5(%arg0: i32) -> (i32, i32) {
    %c0_i32 = arith.constant 0 : i32
    %c0_i32_0 = arith.constant 0 : i32
    %c0_i32_1 = arith.constant 0 : i32
    return %c0_i32, %c0_i32_0 : i32, i32
  }
  func.func @transform_6(%arg0: i32) -> (i32, i32) {
    %c0_i32 = arith.constant 0 : i32
    %c0_i32_0 = arith.constant 0 : i32
    %c0_i32_1 = arith.constant 0 : i32
    return %c0_i32, %c0_i32_0 : i32, i32
  }
  func.func @transform_7(%arg0: i32) -> (i32, i32) {
    %c0_i32 = arith.constant 0 : i32
    %c0_i32_0 = arith.constant 0 : i32
    %c0_i32_1 = arith.constant 0 : i32
    return %c0_i32, %c0_i32_0 : i32, i32
  }
  func.func @transform_8(%arg0: i32) -> (i32, i32) {
    %c0_i32 = arith.constant 0 : i32
    %c0_i32_0 = arith.constant 0 : i32
    %c0_i32_1 = arith.constant 0 : i32
    return %c0_i32, %c0_i32_0 : i32, i32
  }
  func.func @transform_9(%arg0: i32) -> (i32, i32) {
    %c0_i32 = arith.constant 0 : i32
    %c0_i32_0 = arith.constant 0 : i32
    %c0_i32_1 = arith.constant 0 : i32
    return %c0_i32, %c0_i32_0 : i32, i32
  }
  func.func @transform_10(%arg0: i32) -> (i32, i32) {
    %c0_i32 = arith.constant 0 : i32
    %c0_i32_0 = arith.constant 0 : i32
    %c0_i32_1 = arith.constant 0 : i32
    return %c0_i32, %c0_i32_0 : i32, i32
  }
  func.func @transform_11(%arg0: i32) -> (i32, i32) {
    %c0_i32 = arith.constant 0 : i32
    %c0_i32_0 = arith.constant 0 : i32
    %c0_i32_1 = arith.constant 0 : i32
    return %c0_i32, %c0_i32_0 : i32, i32
  }
  func.func @transform_12(%arg0: i32) -> (i32, i32) {
    %c0_i32 = arith.constant 0 : i32
    %c0_i32_0 = arith.constant 0 : i32
    return %arg0, %c0_i32 : i32, i32
  }
}

</mosaic_0001>

<llo_original>
// kernel: tpu_custom_call.1
$region0: #{tpu_custom_call.1}
  #allocation0 [shape = 'u32[]', space=smem, size = 0x4, offset = 0x4, fixed_abs, tag = 'smem constant byte address 0x4 - core index']
  #allocation1 [shape = 'u32[72,128]{1,0:T(1,128)}', space=vmem, size = 0x9000, scoped, tag = 'internal scratch']
  #allocation2 [shape = 'f32[1,1]{1,0:T(1,128)S(1)}', space=vmem, size = 0x200, scoped, tag = 'scoped memory for tpu_custom_call.1']
  #allocation11 [shape = 's32[]', space=sflag, size = 0x4, offset = 0, fixed_abs, tag = 'sflag constant byte address 0x0 - dummy sync flag']
  %s0 = inlined_call_operand.vmem [shape: f32[7], index: 0, kind: input, shape index: {}]
  %s1 = inlined_call_operand.vmem [shape: bf16[7,32,200], index: 1, kind: input, shape index: {}]
  %s2 = inlined_call_operand.vmem [shape: bf16[7,32,200], index: 2, kind: input, shape index: {}]
  %s3 = inlined_call_operand.hbm [shape: bf16[7,32,200], index: 3, kind: input, shape index: {}]
  %s4 = inlined_call_operand.hbm [shape: f32[600,256], index: 4, kind: input, shape index: {}]
  %s5 = inlined_call_operand.vmem [shape: f32[1,256], index: 5, kind: input, shape index: {}]
  %s6 = inlined_call_operand.vmem [shape: f32[256,64], index: 6, kind: input, shape index: {}]
  %s7 = inlined_call_operand.vmem [shape: f32[1,64], index: 7, kind: input, shape index: {}]
  %s8 = inlined_call_operand.vmem [shape: f32[64,8], index: 8, kind: input, shape index: {}]
  %s9 = inlined_call_operand.vmem [shape: f32[1,8], index: 9, kind: input, shape index: {}]
  %s10 = inlined_call_operand.vmem [shape: f32[8,1], index: 10, kind: input, shape index: {}]
  %s11 = inlined_call_operand.<no memory space> [shape: f32[1,1], index: 11, kind: input, shape index: {}]
  %s12 = inlined_call_operand.vmem [shape: f32[32,1], index: 12, kind: output, shape index: {}]
  %s13 = sld [smem:[#allocation0]]
  $region169: #{tpu_custom_call.1} parent=0
    _
  %s15 = ssub.s32 1, %s13
  %s16 = scalar_select 0, %s15, %s13
  %v17 = vstv %s11
  %18 = vst [vmem:[#allocation2] sm:$0x1] %v17
  $region1: #{tpu_custom_call.1} parent=0
    #allocation3 [shape = 'u8[512]{0}', space=smem, size = 0x200, scoped, tag = 'input window, operand 0, single buffered']
    #allocation4 [shape = 's32[2]{0}', space=sflag, size = 0x8, scoped, tag = 'scoped memory for tpu_custom_call.1']
    #allocation5 [shape = 's32[2]{0}', space=sflag, size = 0x8, scoped, tag = 'scoped memory for tpu_custom_call.1']
    #allocation6 [shape = 'u8[114688]{0}', space=vmem, size = 0x1c000, scoped, tag = 'input window, operand 1']
    #allocation7 [shape = 'u8[114688]{0}', space=vmem, size = 0x1c000, scoped, tag = 'input window, operand 2']
    #allocation8 [shape = 'u8[114688]{0}', space=vmem, size = 0x1c000, scoped, tag = 'input window, operand 3']
    #allocation9 [shape = 'u8[614400]{0}', space=vmem, size = 0x96000, scoped, tag = 'input window, operand 4, single buffered']
    #allocation10 [shape = 's32[1]{0}', space=sflag, size = 0x4, scoped, tag = 'scoped memory for tpu_custom_call.1']
    %19 = vsyncpa [#allocation5], 0
    %20 = vsyncpa [#allocation4], 0
    %s21 = scalar_lea.sflag [#allocation4], 1
    %22 = vsyncpa %s21, 0
    %23 = vsyncpa [#allocation10], 0
    loop: start=0, step=1, limit=4
    $region2: #{tpu_custom_call.1} parent=1 // loop_pre_header
      _
    $region3: #{tpu_custom_call.1} parent=1 // loop_header
      %s25 = sphi 0, %s29
      %p26 = scmp.ge.s32.totalorder %s25, 4
      %s33 = sphi 0, %s33
      %s35 = sphi 0, %s33
      %s36 = sphi 0, %s35
      %s50 = sphi 0, %s36
      %s56 = sphi 0, %s58
      %s59 = sphi 0, %s56
      %s60 = sphi 0, %s59
      %s76 = sphi 0, %s60
      %s82 = sphi 0, %s84
      %s85 = sphi 0, %s82
      %s86 = sphi 0, %s85
      %s102 = sphi 0, %s86
      %s108 = sphi 0, %s110
      %s111 = sphi 0, %s108
      %s112 = sphi 0, %s111
      %s128 = sphi 0, %s112
      %s132 = sphi 0, %s132
      %s134 = sphi 0, %s132
      %s135 = sphi 0, %s134
      %s149 = sphi 0, %s135
      %s153 = sphi 0, %s153
      %s155 = sphi 0, %s153
      %s156 = sphi 0, %s155
      %s170 = sphi 0, %s156
      %s174 = sphi 0, %s174
      %s176 = sphi 0, %s174
      %s177 = sphi 0, %s176
      %s191 = sphi 0, %s177
      %s195 = sphi 0, %s195
      %s197 = sphi 0, %s195
      %s198 = sphi 0, %s197
      %s212 = sphi 0, %s198
      %s216 = sphi 0, %s216
      %s218 = sphi 0, %s216
      %s219 = sphi 0, %s218
      %s233 = sphi 0, %s219
      %s237 = sphi 0, %s237
      %s239 = sphi 0, %s237
      %s240 = sphi 0, %s239
      %s254 = sphi 0, %s240
      %s258 = sphi 0, %s258
      %s260 = sphi 0, %s258
      %s261 = sphi 0, %s260
      %s275 = sphi 0, %s261
      %s279 = sphi 0, %s279
      %s281 = sphi 0, %s279
      %s282 = sphi 0, %s281
      %s296 = sphi 0, %s282
      %s302 = sphi 0, %s304
      %s305 = sphi 0, %s302
      %s306 = sphi 0, %s305
      %s322 = sphi 0, %s306
    $region4: #{tpu_custom_call.1} parent=1 // loop_header_branch
      %28 = sbr.rel (%p26) target = $region8
    $region5: #{tpu_custom_call.1} parent=1 // loop_body
      %s30 = ssub.s32 %s25, 1
      %s31 = ssub.s32 %s25, 2
      %s32 = sadd.s32 %s25, 1
      %s34 = sadd.s32 %s33, 1
      %p37 = scmp.eq.s32.totalorder %s25, 1
      %p38 = scmp.ne.s32.totalorder %s33, %s35
      %p39 = scmp.eq.s32.totalorder %s25, 0
      %p40 = por %p38, %p39
      %p41 = scmp.ne.s32.totalorder %s33, %s35
      %p42 = scmp.eq.s32.totalorder %s30, 1
      %p43 = por %p41, %p42
      %p44 = scmp.ne.s32.totalorder %s35, %s36
      %p45 = scmp.eq.s32.totalorder %s30, 0
      %p46 = por %p44, %p45
      %p47 = scmp.ne.s32.totalorder %s35, %s36
      %p48 = scmp.eq.s32.totalorder %s31, 1
      %p49 = por %p47, %p48
      %p51 = scmp.ne.s32.totalorder %s36, %s50
      %p52 = scmp.eq.s32.totalorder %s31, 0
      %p53 = por %p51, %p52
      %s54 = ssub.s32 %s25, %s32
      %p55 = scmp.eq.s32.totalorder %s54, 0
      %s57 = sadd.s32 %s56, 1
      %s58 = scalar_select %p55, %s56, %s57
      %p61 = pneg %p55
      %p62 = scmp.eq.s32.totalorder %s25, 1
      %p63 = por %p61, %p62
      %p64 = scmp.ne.s32.totalorder %s56, %s59
      %p65 = scmp.eq.s32.totalorder %s25, 0
      %p66 = por %p64, %p65
      %p67 = scmp.ne.s32.totalorder %s56, %s59
      %p68 = scmp.eq.s32.totalorder %s30, 1
      %p69 = por %p67, %p68
      %p70 = scmp.ne.s32.totalorder %s59, %s60
      %p71 = scmp.eq.s32.totalorder %s30, 0
      %p72 = por %p70, %p71
      %p73 = scmp.ne.s32.totalorder %s59, %s60
      %p74 = scmp.eq.s32.totalorder %s31, 1
      %p75 = por %p73, %p74
      %p77 = scmp.ne.s32.totalorder %s60, %s76
      %p78 = scmp.eq.s32.totalorder %s31, 0
      %p79 = por %p77, %p78
      %s80 = ssub.s32 %s25, %s32
      %p81 = scmp.eq.s32.totalorder %s80, 0
      %s83 = sadd.s32 %s82, 1
      %s84 = scalar_select %p81, %s82, %s83
      %p87 = pneg %p81
      %p88 = scmp.eq.s32.totalorder %s25, 1
      %p89 = por %p87, %p88
      %p90 = scmp.ne.s32.totalorder %s82, %s85
      %p91 = scmp.eq.s32.totalorder %s25, 0
      %p92 = por %p90, %p91
      %p93 = scmp.ne.s32.totalorder %s82, %s85
      %p94 = scmp.eq.s32.totalorder %s30, 1
      %p95 = por %p93, %p94
      %p96 = scmp.ne.s32.totalorder %s85, %s86
      %p97 = scmp.eq.s32.totalorder %s30, 0
      %p98 = por %p96, %p97
      %p99 = scmp.ne.s32.totalorder %s85, %s86
      %p100 = scmp.eq.s32.totalorder %s31, 1
      %p101 = por %p99, %p100
      %p103 = scmp.ne.s32.totalorder %s86, %s102
      %p104 = scmp.eq.s32.totalorder %s31, 0
      %p105 = por %p103, %p104
      %s106 = ssub.s32 %s25, %s32
      %p107 = scmp.eq.s32.totalorder %s106, 0
      %s109 = sadd.s32 %s108, 1
      %s110 = scalar_select %p107, %s108, %s109
      %p113 = pneg %p107
      %p114 = scmp.eq.s32.totalorder %s25, 1
      %p115 = por %p113, %p114
      %p116 = scmp.ne.s32.totalorder %s108, %s111
      %p117 = scmp.eq.s32.totalorder %s25, 0
      %p118 = por %p116, %p117
      %p119 = scmp.ne.s32.totalorder %s108, %s111
      %p120 = scmp.eq.s32.totalorder %s30, 1
      %p121 = por %p119, %p120
      %p122 = scmp.ne.s32.totalorder %s111, %s112
      %p123 = scmp.eq.s32.totalorder %s30, 0
      %p124 = por %p122, %p123
      %p125 = scmp.ne.s32.totalorder %s111, %s112
      %p126 = scmp.eq.s32.totalorder %s31, 1
      %p127 = por %p125, %p126
      %p129 = scmp.ne.s32.totalorder %s112, %s128
      %p130 = scmp.eq.s32.totalorder %s31, 0
      %p131 = por %p129, %p130
      %s133 = sadd.s32 %s132, 1
      %p136 = scmp.eq.s32.totalorder %s25, 1
      %p137 = scmp.ne.s32.totalorder %s132, %s134
      %p138 = scmp.eq.s32.totalorder %s25, 0
      %p139 = por %p137, %p138
      %p140 = scmp.ne.s32.totalorder %s132, %s134
      %p141 = scmp.eq.s32.totalorder %s30, 1
      %p142 = por %p140, %p141
      %p143 = scmp.ne.s32.totalorder %s134, %s135
      %p144 = scmp.eq.s32.totalorder %s30, 0
      %p145 = por %p143, %p144
      %p146 = scmp.ne.s32.totalorder %s134, %s135
      %p147 = scmp.eq.s32.totalorder %s31, 1
      %p148 = por %p146, %p147
      %p150 = scmp.ne.s32.totalorder %s135, %s149
      %p151 = scmp.eq.s32.totalorder %s31, 0
      %p152 = por %p150, %p151
      %s154 = sadd.s32 %s153, 1
      %p157 = scmp.eq.s32.totalorder %s25, 1
      %p158 = scmp.ne.s32.totalorder %s153, %s155
      %p159 = scmp.eq.s32.totalorder %s25, 0
      %p160 = por %p158, %p159
      %p161 = scmp.ne.s32.totalorder %s153, %s155
      %p162 = scmp.eq.s32.totalorder %s30, 1
      %p163 = por %p161, %p162
      %p164 = scmp.ne.s32.totalorder %s155, %s156
      %p165 = scmp.eq.s32.totalorder %s30, 0
      %p166 = por %p164, %p165
      %p167 = scmp.ne.s32.totalorder %s155, %s156
      %p168 = scmp.eq.s32.totalorder %s31, 1
      %p169 = por %p167, %p168
      %p171 = scmp.ne.s32.totalorder %s156, %s170
      %p172 = scmp.eq.s32.totalorder %s31, 0
      %p173 = por %p171, %p172
      %s175 = sadd.s32 %s174, 1
      %p178 = scmp.eq.s32.totalorder %s25, 1
      %p179 = scmp.ne.s32.totalorder %s174, %s176
      %p180 = scmp.eq.s32.totalorder %s25, 0
      %p181 = por %p179, %p180
      %p182 = scmp.ne.s32.totalorder %s174, %s176
      %p183 = scmp.eq.s32.totalorder %s30, 1
      %p184 = por %p182, %p183
      %p185 = scmp.ne.s32.totalorder %s176, %s177
      %p186 = scmp.eq.s32.totalorder %s30, 0
      %p187 = por %p185, %p186
      %p188 = scmp.ne.s32.totalorder %s176, %s177
      %p189 = scmp.eq.s32.totalorder %s31, 1
      %p190 = por %p188, %p189
      %p192 = scmp.ne.s32.totalorder %s177, %s191
      %p193 = scmp.eq.s32.totalorder %s31, 0
      %p194 = por %p192, %p193
      %s196 = sadd.s32 %s195, 1
      %p199 = scmp.eq.s32.totalorder %s25, 1
      %p200 = scmp.ne.s32.totalorder %s195, %s197
      %p201 = scmp.eq.s32.totalorder %s25, 0
      %p202 = por %p200, %p201
      %p203 = scmp.ne.s32.totalorder %s195, %s197
      %p204 = scmp.eq.s32.totalorder %s30, 1
      %p205 = por %p203, %p204
      %p206 = scmp.ne.s32.totalorder %s197, %s198
      %p207 = scmp.eq.s32.totalorder %s30, 0
      %p208 = por %p206, %p207
      %p209 = scmp.ne.s32.totalorder %s197, %s198
      %p210 = scmp.eq.s32.totalorder %s31, 1
      %p211 = por %p209, %p210
      %p213 = scmp.ne.s32.totalorder %s198, %s212
      %p214 = scmp.eq.s32.totalorder %s31, 0
      %p215 = por %p213, %p214
      %s217 = sadd.s32 %s216, 1
      %p220 = scmp.eq.s32.totalorder %s25, 1
      %p221 = scmp.ne.s32.totalorder %s216, %s218
      %p222 = scmp.eq.s32.totalorder %s25, 0
      %p223 = por %p221, %p222
      %p224 = scmp.ne.s32.totalorder %s216, %s218
      %p225 = scmp.eq.s32.totalorder %s30, 1
      %p226 = por %p224, %p225
      %p227 = scmp.ne.s32.totalorder %s218, %s219
      %p228 = scmp.eq.s32.totalorder %s30, 0
      %p229 = por %p227, %p228
      %p230 = scmp.ne.s32.totalorder %s218, %s219
      %p231 = scmp.eq.s32.totalorder %s31, 1
      %p232 = por %p230, %p231
      %p234 = scmp.ne.s32.totalorder %s219, %s233
      %p235 = scmp.eq.s32.totalorder %s31, 0
      %p236 = por %p234, %p235
      %s238 = sadd.s32 %s237, 1
      %p241 = scmp.eq.s32.totalorder %s25, 1
      %p242 = scmp.ne.s32.totalorder %s237, %s239
      %p243 = scmp.eq.s32.totalorder %s25, 0
      %p244 = por %p242, %p243
      %p245 = scmp.ne.s32.totalorder %s237, %s239
      %p246 = scmp.eq.s32.totalorder %s30, 1
      %p247 = por %p245, %p246
      %p248 = scmp.ne.s32.totalorder %s239, %s240
      %p249 = scmp.eq.s32.totalorder %s30, 0
      %p250 = por %p248, %p249
      %p251 = scmp.ne.s32.totalorder %s239, %s240
      %p252 = scmp.eq.s32.totalorder %s31, 1
      %p253 = por %p251, %p252
      %p255 = scmp.ne.s32.totalorder %s240, %s254
      %p256 = scmp.eq.s32.totalorder %s31, 0
      %p257 = por %p255, %p256
      %s259 = sadd.s32 %s258, 1
      %p262 = scmp.eq.s32.totalorder %s25, 1
      %p263 = scmp.ne.s32.totalorder %s258, %s260
      %p264 = scmp.eq.s32.totalorder %s25, 0
      %p265 = por %p263, %p264
      %p266 = scmp.ne.s32.totalorder %s258, %s260
      %p267 = scmp.eq.s32.totalorder %s30, 1
      %p268 = por %p266, %p267
      %p269 = scmp.ne.s32.totalorder %s260, %s261
      %p270 = scmp.eq.s32.totalorder %s30, 0
      %p271 = por %p269, %p270
      %p272 = scmp.ne.s32.totalorder %s260, %s261
      %p273 = scmp.eq.s32.totalorder %s31, 1
      %p274 = por %p272, %p273
      %p276 = scmp.ne.s32.totalorder %s261, %s275
      %p277 = scmp.eq.s32.totalorder %s31, 0
      %p278 = por %p276, %p277
      %s280 = sadd.s32 %s279, 1
      %p283 = scmp.eq.s32.totalorder %s25, 1
      %p284 = scmp.ne.s32.totalorder %s279, %s281
      %p285 = scmp.eq.s32.totalorder %s25, 0
      %p286 = por %p284, %p285
      %p287 = scmp.ne.s32.totalorder %s279, %s281
      %p288 = scmp.eq.s32.totalorder %s30, 1
      %p289 = por %p287, %p288
      %p290 = scmp.ne.s32.totalorder %s281, %s282
      %p291 = scmp.eq.s32.totalorder %s30, 0
      %p292 = por %p290, %p291
      %p293 = scmp.ne.s32.totalorder %s281, %s282
      %p294 = scmp.eq.s32.totalorder %s31, 1
      %p295 = por %p293, %p294
      %p297 = scmp.ne.s32.totalorder %s282, %s296
      %p298 = scmp.eq.s32.totalorder %s31, 0
      %p299 = por %p297, %p298
      %s300 = ssub.s32 %s25, %s32
      %p301 = scmp.eq.s32.totalorder %s300, 0
      %s303 = sadd.s32 %s302, 1
      %s304 = scalar_select %p301, %s302, %s303
      %p307 = pneg %p301
      %p308 = scmp.eq.s32.totalorder %s25, 1
      %p309 = por %p307, %p308
      %p310 = scmp.ne.s32.totalorder %s302, %s305
      %p311 = scmp.eq.s32.totalorder %s25, 0
      %p312 = por %p310, %p311
      %p313 = scmp.ne.s32.totalorder %s302, %s305
      %p314 = scmp.eq.s32.totalorder %s30, 1
      %p315 = por %p313, %p314
      %p316 = scmp.ne.s32.totalorder %s305, %s306
      %p317 = scmp.eq.s32.totalorder %s30, 0
      %p318 = por %p316, %p317
      %p319 = scmp.ne.s32.totalorder %s305, %s306
      %p320 = scmp.eq.s32.totalorder %s31, 1
      %p321 = por %p319, %p320
      %p323 = scmp.ne.s32.totalorder %s306, %s322
      %p324 = scmp.eq.s32.totalorder %s31, 0
      %p325 = por %p323, %p324
      %p326 = scmp.le.s32.totalorder 1, %s25
      %p327 = scmp.lt.s32.totalorder %s25, 3
      %p328 = pnand %p326, %p327
      %p329 = pneg %p328
      // Predicated region
      $region9: #{tpu_custom_call.1} parent=5 // pred_check
        _
      $region10: #{tpu_custom_call.1} parent=5 // pred_check_branch
        %331 = sbr.rel (%p328) target = $region12
      $region11: #{tpu_custom_call.1} parent=5 // pred_region
        %s332 = ssub.s32 %s25, 1
        // Predicated region
        $region13: #{tpu_custom_call.1} parent=11 // pred_check
          %p333 = pneg %p46
        $region14: #{tpu_custom_call.1} parent=11 // pred_check_branch
          %335 = sbr.rel (%p333) target = $region16
        $region15: #{tpu_custom_call.1} parent=11 // pred_region
          %337 = vsyncadd [#allocation5], 0
          %s339 = sshll.u32 %s0, 4
          %s340 = int_to_ptr.vmem [resolvable:$true] %s339
          %342 = dma.vmem_to_smem %s340, 16, [#allocation3], [#allocation5]
        $region16: #{tpu_custom_call.1} parent=11 // pred_fallthru
          _
        // Predicated region
        $region17: #{tpu_custom_call.1} parent=11 // pred_check
          %p343 = pneg %p145
        $region18: #{tpu_custom_call.1} parent=11 // pred_check_branch
          %345 = sbr.rel (%p343) target = $region20
        $region19: #{tpu_custom_call.1} parent=11 // pred_region
          %347 = vsyncadd [#allocation10], 0
          %s348 = sshll.u32 %s4, 4
          %s349 = int_to_ptr.hbm [resolvable:$true] %s348
          %s350 = sshll.u32 [#allocation9], 4
          %s351 = int_to_ptr.vmem [resolvable:$true] %s350
          %356 = dma.hbm_to_vmem [thread:$0]  %s349, 19200, %s351, [#allocation10], 256, 256, 16
        $region20: #{tpu_custom_call.1} parent=11 // pred_fallthru
          _
        // Predicated region
        $region21: #{tpu_custom_call.1} parent=11 // pred_check
          %p357 = pneg %p166
        $region22: #{tpu_custom_call.1} parent=11 // pred_check_branch
          %359 = sbr.rel (%p357) target = $region24
        $region23: #{tpu_custom_call.1} parent=11 // pred_region
          _
        $region24: #{tpu_custom_call.1} parent=11 // pred_fallthru
          _
        // Predicated region
        $region25: #{tpu_custom_call.1} parent=11 // pred_check
          %p360 = pneg %p187
        $region26: #{tpu_custom_call.1} parent=11 // pred_check_branch
          %362 = sbr.rel (%p360) target = $region28
        $region27: #{tpu_custom_call.1} parent=11 // pred_region
          _
        $region28: #{tpu_custom_call.1} parent=11 // pred_fallthru
          _
        // Predicated region
        $region29: #{tpu_custom_call.1} parent=11 // pred_check
          %p363 = pneg %p208
        $region30: #{tpu_custom_call.1} parent=11 // pred_check_branch
          %365 = sbr.rel (%p363) target = $region32
        $region31: #{tpu_custom_call.1} parent=11 // pred_region
          _
        $region32: #{tpu_custom_call.1} parent=11 // pred_fallthru
          _
        // Predicated region
        $region33: #{tpu_custom_call.1} parent=11 // pred_check
          %p366 = pneg %p229
        $region34: #{tpu_custom_call.1} parent=11 // pred_check_branch
          %368 = sbr.rel (%p366) target = $region36
        $region35: #{tpu_custom_call.1} parent=11 // pred_region
          _
        $region36: #{tpu_custom_call.1} parent=11 // pred_fallthru
          _
        // Predicated region
        $region37: #{tpu_custom_call.1} parent=11 // pred_check
          %p369 = pneg %p250
        $region38: #{tpu_custom_call.1} parent=11 // pred_check_branch
          %371 = sbr.rel (%p369) target = $region40
        $region39: #{tpu_custom_call.1} parent=11 // pred_region
          _
        $region40: #{tpu_custom_call.1} parent=11 // pred_fallthru
          _
        // Predicated region
        $region41: #{tpu_custom_call.1} parent=11 // pred_check
          %p372 = pneg %p271
        $region42: #{tpu_custom_call.1} parent=11 // pred_check_branch
          %374 = sbr.rel (%p372) target = $region44
        $region43: #{tpu_custom_call.1} parent=11 // pred_region
          _
        $region44: #{tpu_custom_call.1} parent=11 // pred_fallthru
          _
        // Predicated region
        $region45: #{tpu_custom_call.1} parent=11 // pred_check
          %p375 = pneg %p292
        $region46: #{tpu_custom_call.1} parent=11 // pred_check_branch
          %377 = sbr.rel (%p375) target = $region48
        $region47: #{tpu_custom_call.1} parent=11 // pred_region
          _
        $region48: #{tpu_custom_call.1} parent=11 // pred_fallthru
          _
      $region12: #{tpu_custom_call.1} parent=5 // pred_fallthru
        _
      %p378 = scmp.lt.s32.totalorder %s25, 2
      // Predicated region
      $region49: #{tpu_custom_call.1} parent=5 // pred_check
        %p379 = pneg %p378
      $region50: #{tpu_custom_call.1} parent=5 // pred_check_branch
        %381 = sbr.rel (%p379) target = $region52
      $region51: #{tpu_custom_call.1} parent=5 // pred_region
        // Predicated region
        $region53: #{tpu_custom_call.1} parent=51 // pred_check
          %p382 = pneg %p66
        $region54: #{tpu_custom_call.1} parent=51 // pred_check_branch
          %384 = sbr.rel (%p382) target = $region56
        $region55: #{tpu_custom_call.1} parent=51 // pred_region
          %s385 = sand.u32 %s56, 1
          %s386 = sand.u32 %s56, 1
          %s387 = smul.addr %s386, 112
          %s388 = scalar_lea.vmem [#allocation6], %s387
          %s389 = smul.u32 2, %s25
          %s390 = smul.addr %s389, 2
          %s391 = smul.addr %s390, 4
          %s392 = scalar_lea.vmem %s1, %s391
          // Predicated region
          $region57: #{tpu_custom_call.1} parent=55 // pred_check
            _
          $region58: #{tpu_custom_call.1} parent=55 // pred_check_branch
            %394 = sbr.rel (0) target = $region60
          $region59: #{tpu_custom_call.1} parent=55 // pred_region
            // Predicated region
            $region61: #{tpu_custom_call.1} parent=59 // pred_check
              _
            $region62: #{tpu_custom_call.1} parent=59 // pred_check_branch
              %396 = sbr.rel (0) target = $region64
            $region63: #{tpu_custom_call.1} parent=59 // pred_region
              // Predicated region
              $region76: #{tpu_custom_call.1} parent=63 // pred_check
                _
              $region77: #{tpu_custom_call.1} parent=63 // pred_check_branch
                %438 = sbr.rel (0) target = $region79
              $region78: #{tpu_custom_call.1} parent=63 // pred_region
                loop: start=0, step=1, limit=1
                $region80: #{tpu_custom_call.1} parent=78 // loop_pre_header
                  _
                $region81: #{tpu_custom_call.1} parent=78 // loop_header
                  %s440 = sphi 0, %s444
                  %p441 = scmp.ge.s32.totalorder %s440, 1
                  %s445 = sphi %s392, %s392
                  %s446 = sphi %s388, %s388
                $region82: #{tpu_custom_call.1} parent=78 // loop_header_branch
                  %443 = sbr.rel (%p441) target = $region86
                $region83: #{tpu_custom_call.1} parent=78 // loop_body
                  %v447 = vld [vmem:[%s445] sm:$0xff]
                  %448 = vst [vmem:[%s446] sm:$0xff] %v447
                  %v449 = vld [vmem:[%s445 + $0x8] sm:$0xff]
                  %450 = vst [vmem:[%s446 + $0x8] sm:$0xff] %v449
                  %v451 = vld [vmem:[%s445 + $0x20] sm:$0xff]
                  %452 = vst [vmem:[%s446 + $0x10] sm:$0xff] %v451
                  %v453 = vld [vmem:[%s445 + $0x28] sm:$0xff]
                  %454 = vst [vmem:[%s446 + $0x18] sm:$0xff] %v453
                  %v455 = vld [vmem:[%s445 + $0x40] sm:$0xff]
                  %456 = vst [vmem:[%s446 + $0x20] sm:$0xff] %v455
                  %v457 = vld [vmem:[%s445 + $0x48] sm:$0xff]
                  %458 = vst [vmem:[%s446 + $0x28] sm:$0xff] %v457
                  %v459 = vld [vmem:[%s445 + $0x60] sm:$0xff]
                  %460 = vst [vmem:[%s446 + $0x30] sm:$0xff] %v459
                  %v461 = vld [vmem:[%s445 + $0x68] sm:$0xff]
                  %462 = vst [vmem:[%s446 + $0x38] sm:$0xff] %v461
                  %v463 = vld [vmem:[%s445 + $0x80] sm:$0xff]
                  %464 = vst [vmem:[%s446 + $0x40] sm:$0xff] %v463
                  %v465 = vld [vmem:[%s445 + $0x88] sm:$0xff]
                  %466 = vst [vmem:[%s446 + $0x48] sm:$0xff] %v465
                  %v467 = vld [vmem:[%s445 + $0xa0] sm:$0xff]
                  %468 = vst [vmem:[%s446 + $0x50] sm:$0xff] %v467
                  %v469 = vld [vmem:[%s445 + $0xa8] sm:$0xff]
                  %470 = vst [vmem:[%s446 + $0x58] sm:$0xff] %v469
                  %v471 = vld [vmem:[%s445 + $0xc0] sm:$0xff]
                  %472 = vst [vmem:[%s446 + $0x60] sm:$0xff] %v471
                  %v473 = vld [vmem:[%s445 + $0xc8] sm:$0xff]
                  %474 = vst [vmem:[%s446 + $0x68] sm:$0xff] %v473
                $region84: #{tpu_custom_call.1} parent=78 // loop_footer
                  %s444 = sadd.s32 1, %s440
                $region85: #{tpu_custom_call.1} parent=78 // loop_footer_branch
                  %439 = sbr.rel target = $region81
                $region86: #{tpu_custom_call.1} parent=78 // loop_exit
                  _
              $region79: #{tpu_custom_call.1} parent=63 // pred_fallthru
                _
              // Predicated region
              $region87: #{tpu_custom_call.1} parent=63 // pred_check
                _
              $region88: #{tpu_custom_call.1} parent=63 // pred_check_branch
                %476 = sbr.rel target = $region90
              $region89: #{tpu_custom_call.1} parent=63 // pred_region
                _
              $region90: #{tpu_custom_call.1} parent=63 // pred_fallthru
                _
            $region64: #{tpu_custom_call.1} parent=59 // pred_fallthru
              _
            // Predicated region
            $region65: #{tpu_custom_call.1} parent=59 // pred_check
              _
            $region66: #{tpu_custom_call.1} parent=59 // pred_check_branch
              %398 = sbr.rel target = $region68
            $region67: #{tpu_custom_call.1} parent=59 // pred_region
              %s400 = ssub.s32 256, 1
              loop: start=0, step=1, limit=1
              $region69: #{tpu_custom_call.1} parent=67 // loop_pre_header
                _
              $region70: #{tpu_custom_call.1} parent=67 // loop_header
                %s402 = sphi 0, %s406
                %p403 = scmp.ge.s32.totalorder %s402, 1
                %s407 = sphi %s392, %s392
                %s408 = sphi %s388, %s388
              $region71: #{tpu_custom_call.1} parent=67 // loop_header_branch
                %405 = sbr.rel (%p403) target = $region75
              $region72: #{tpu_custom_call.1} parent=67 // loop_body
                %v409 = vld [vmem:[%s407] sm:%s400]
                %410 = vst [vmem:[%s408] sm:%s400] %v409
                %v411 = vld [vmem:[%s407 + $0x8] sm:%s400]
                %412 = vst [vmem:[%s408 + $0x8] sm:%s400] %v411
                %v413 = vld [vmem:[%s407 + $0x20] sm:%s400]
                %414 = vst [vmem:[%s408 + $0x10] sm:%s400] %v413
                %v415 = vld [vmem:[%s407 + $0x28] sm:%s400]
                %416 = vst [vmem:[%s408 + $0x18] sm:%s400] %v415
                %v417 = vld [vmem:[%s407 + $0x40] sm:%s400]
                %418 = vst [vmem:[%s408 + $0x20] sm:%s400] %v417
                %v419 = vld [vmem:[%s407 + $0x48] sm:%s400]
                %420 = vst [vmem:[%s408 + $0x28] sm:%s400] %v419
                %v421 = vld [vmem:[%s407 + $0x60] sm:%s400]
                %422 = vst [vmem:[%s408 + $0x30] sm:%s400] %v421
                %v423 = vld [vmem:[%s407 + $0x68] sm:%s400]
                %424 = vst [vmem:[%s408 + $0x38] sm:%s400] %v423
                %v425 = vld [vmem:[%s407 + $0x80] sm:%s400]
                %426 = vst [vmem:[%s408 + $0x40] sm:%s400] %v425
                %v427 = vld [vmem:[%s407 + $0x88] sm:%s400]
                %428 = vst [vmem:[%s408 + $0x48] sm:%s400] %v427
                %v429 = vld [vmem:[%s407 + $0xa0] sm:%s400]
                %430 = vst [vmem:[%s408 + $0x50] sm:%s400] %v429
                %v431 = vld [vmem:[%s407 + $0xa8] sm:%s400]
                %432 = vst [vmem:[%s408 + $0x58] sm:%s400] %v431
                %v433 = vld [vmem:[%s407 + $0xc0] sm:%s400]
                %434 = vst [vmem:[%s408 + $0x60] sm:%s400] %v433
                %v435 = vld [vmem:[%s407 + $0xc8] sm:%s400]
                %436 = vst [vmem:[%s408 + $0x68] sm:%s400] %v435
              $region73: #{tpu_custom_call.1} parent=67 // loop_footer
                %s406 = sadd.s32 1, %s402
              $region74: #{tpu_custom_call.1} parent=67 // loop_footer_branch
                %401 = sbr.rel target = $region70
              $region75: #{tpu_custom_call.1} parent=67 // loop_exit
                _
            $region68: #{tpu_custom_call.1} parent=59 // pred_fallthru
              _
          $region60: #{tpu_custom_call.1} parent=55 // pred_fallthru
            _
          %477 = vnop
        $region56: #{tpu_custom_call.1} parent=51 // pred_fallthru
          _
        // Predicated region
        $region91: #{tpu_custom_call.1} parent=51 // pred_check
          %p478 = pneg %p92
        $region92: #{tpu_custom_call.1} parent=51 // pred_check_branch
          %480 = sbr.rel (%p478) target = $region94
        $region93: #{tpu_custom_call.1} parent=51 // pred_region
          %s481 = sand.u32 %s82, 1
          %s482 = sand.u32 %s82, 1
          %s483 = smul.addr %s482, 112
          %s484 = scalar_lea.vmem [#allocation7], %s483
          %s485 = smul.u32 2, %s25
          %s486 = smul.addr %s485, 2
          %s487 = smul.addr %s486, 4
          %s488 = scalar_lea.vmem %s2, %s487
          // Predicated region
          $region95: #{tpu_custom_call.1} parent=93 // pred_check
            _
          $region96: #{tpu_custom_call.1} parent=93 // pred_check_branch
            %490 = sbr.rel (0) target = $region98
          $region97: #{tpu_custom_call.1} parent=93 // pred_region
            // Predicated region
            $region99: #{tpu_custom_call.1} parent=97 // pred_check
              _
            $region100: #{tpu_custom_call.1} parent=97 // pred_check_branch
              %492 = sbr.rel (0) target = $region102
            $region101: #{tpu_custom_call.1} parent=97 // pred_region
              // Predicated region
              $region114: #{tpu_custom_call.1} parent=101 // pred_check
                _
              $region115: #{tpu_custom_call.1} parent=101 // pred_check_branch
                %534 = sbr.rel (0) target = $region117
              $region116: #{tpu_custom_call.1} parent=101 // pred_region
                loop: start=0, step=1, limit=1
                $region118: #{tpu_custom_call.1} parent=116 // loop_pre_header
                  _
                $region119: #{tpu_custom_call.1} parent=116 // loop_header
                  %s536 = sphi 0, %s540
                  %p537 = scmp.ge.s32.totalorder %s536, 1
                  %s541 = sphi %s488, %s488
                  %s542 = sphi %s484, %s484
                $region120: #{tpu_custom_call.1} parent=116 // loop_header_branch
                  %539 = sbr.rel (%p537) target = $region124
                $region121: #{tpu_custom_call.1} parent=116 // loop_body
                  %v543 = vld [vmem:[%s541] sm:$0xff]
                  %544 = vst [vmem:[%s542] sm:$0xff] %v543
                  %v545 = vld [vmem:[%s541 + $0x8] sm:$0xff]
                  %546 = vst [vmem:[%s542 + $0x8] sm:$0xff] %v545
                  %v547 = vld [vmem:[%s541 + $0x20] sm:$0xff]
                  %548 = vst [vmem:[%s542 + $0x10] sm:$0xff] %v547
                  %v549 = vld [vmem:[%s541 + $0x28] sm:$0xff]
                  %550 = vst [vmem:[%s542 + $0x18] sm:$0xff] %v549
                  %v551 = vld [vmem:[%s541 + $0x40] sm:$0xff]
                  %552 = vst [vmem:[%s542 + $0x20] sm:$0xff] %v551
                  %v553 = vld [vmem:[%s541 + $0x48] sm:$0xff]
                  %554 = vst [vmem:[%s542 + $0x28] sm:$0xff] %v553
                  %v555 = vld [vmem:[%s541 + $0x60] sm:$0xff]
                  %556 = vst [vmem:[%s542 + $0x30] sm:$0xff] %v555
                  %v557 = vld [vmem:[%s541 + $0x68] sm:$0xff]
                  %558 = vst [vmem:[%s542 + $0x38] sm:$0xff] %v557
                  %v559 = vld [vmem:[%s541 + $0x80] sm:$0xff]
                  %560 = vst [vmem:[%s542 + $0x40] sm:$0xff] %v559
                  %v561 = vld [vmem:[%s541 + $0x88] sm:$0xff]
                  %562 = vst [vmem:[%s542 + $0x48] sm:$0xff] %v561
                  %v563 = vld [vmem:[%s541 + $0xa0] sm:$0xff]
                  %564 = vst [vmem:[%s542 + $0x50] sm:$0xff] %v563
                  %v565 = vld [vmem:[%s541 + $0xa8] sm:$0xff]
                  %566 = vst [vmem:[%s542 + $0x58] sm:$0xff] %v565
                  %v567 = vld [vmem:[%s541 + $0xc0] sm:$0xff]
                  %568 = vst [vmem:[%s542 + $0x60] sm:$0xff] %v567
                  %v569 = vld [vmem:[%s541 + $0xc8] sm:$0xff]
                  %570 = vst [vmem:[%s542 + $0x68] sm:$0xff] %v569
                $region122: #{tpu_custom_call.1} parent=116 // loop_footer
                  %s540 = sadd.s32 1, %s536
                $region123: #{tpu_custom_call.1} parent=116 // loop_footer_branch
                  %535 = sbr.rel target = $region119
                $region124: #{tpu_custom_call.1} parent=116 // loop_exit
                  _
              $region117: #{tpu_custom_call.1} parent=101 // pred_fallthru
                _
              // Predicated region
              $region125: #{tpu_custom_call.1} parent=101 // pred_check
                _
              $region126: #{tpu_custom_call.1} parent=101 // pred_check_branch
                %572 = sbr.rel target = $region128
              $region127: #{tpu_custom_call.1} parent=101 // pred_region
                _
              $region128: #{tpu_custom_call.1} parent=101 // pred_fallthru
                _
            $region102: #{tpu_custom_call.1} parent=97 // pred_fallthru
              _
            // Predicated region
            $region103: #{tpu_custom_call.1} parent=97 // pred_check
              _
            $region104: #{tpu_custom_call.1} parent=97 // pred_check_branch
              %494 = sbr.rel target = $region106
            $region105: #{tpu_custom_call.1} parent=97 // pred_region
              %s496 = ssub.s32 256, 1
              loop: start=0, step=1, limit=1
              $region107: #{tpu_custom_call.1} parent=105 // loop_pre_header
                _
              $region108: #{tpu_custom_call.1} parent=105 // loop_header
                %s498 = sphi 0, %s502
                %p499 = scmp.ge.s32.totalorder %s498, 1
                %s503 = sphi %s488, %s488
                %s504 = sphi %s484, %s484
              $region109: #{tpu_custom_call.1} parent=105 // loop_header_branch
                %501 = sbr.rel (%p499) target = $region113
              $region110: #{tpu_custom_call.1} parent=105 // loop_body
                %v505 = vld [vmem:[%s503] sm:%s496]
                %506 = vst [vmem:[%s504] sm:%s496] %v505
                %v507 = vld [vmem:[%s503 + $0x8] sm:%s496]
                %508 = vst [vmem:[%s504 + $0x8] sm:%s496] %v507
                %v509 = vld [vmem:[%s503 + $0x20] sm:%s496]
                %510 = vst [vmem:[%s504 + $0x10] sm:%s496] %v509
                %v511 = vld [vmem:[%s503 + $0x28] sm:%s496]
                %512 = vst [vmem:[%s504 + $0x18] sm:%s496] %v511
                %v513 = vld [vmem:[%s503 + $0x40] sm:%s496]
                %514 = vst [vmem:[%s504 + $0x20] sm:%s496] %v513
                %v515 = vld [vmem:[%s503 + $0x48] sm:%s496]
                %516 = vst [vmem:[%s504 + $0x28] sm:%s496] %v515
                %v517 = vld [vmem:[%s503 + $0x60] sm:%s496]
                %518 = vst [vmem:[%s504 + $0x30] sm:%s496] %v517
                %v519 = vld [vmem:[%s503 + $0x68] sm:%s496]
                %520 = vst [vmem:[%s504 + $0x38] sm:%s496] %v519
                %v521 = vld [vmem:[%s503 + $0x80] sm:%s496]
                %522 = vst [vmem:[%s504 + $0x40] sm:%s496] %v521
                %v523 = vld [vmem:[%s503 + $0x88] sm:%s496]
                %524 = vst [vmem:[%s504 + $0x48] sm:%s496] %v523
                %v525 = vld [vmem:[%s503 + $0xa0] sm:%s496]
                %526 = vst [vmem:[%s504 + $0x50] sm:%s496] %v525
                %v527 = vld [vmem:[%s503 + $0xa8] sm:%s496]
                %528 = vst [vmem:[%s504 + $0x58] sm:%s496] %v527
                %v529 = vld [vmem:[%s503 + $0xc0] sm:%s496]
                %530 = vst [vmem:[%s504 + $0x60] sm:%s496] %v529
                %v531 = vld [vmem:[%s503 + $0xc8] sm:%s496]
                %532 = vst [vmem:[%s504 + $0x68] sm:%s496] %v531
              $region111: #{tpu_custom_call.1} parent=105 // loop_footer
                %s502 = sadd.s32 1, %s498
              $region112: #{tpu_custom_call.1} parent=105 // loop_footer_branch
                %497 = sbr.rel target = $region108
              $region113: #{tpu_custom_call.1} parent=105 // loop_exit
                _
            $region106: #{tpu_custom_call.1} parent=97 // pred_fallthru
              _
          $region98: #{tpu_custom_call.1} parent=93 // pred_fallthru
            _
          %573 = vnop
        $region94: #{tpu_custom_call.1} parent=51 // pred_fallthru
          _
        // Predicated region
        $region129: #{tpu_custom_call.1} parent=51 // pred_check
          %p574 = pneg %p118
        $region130: #{tpu_custom_call.1} parent=51 // pred_check_branch
          %576 = sbr.rel (%p574) target = $region132
        $region131: #{tpu_custom_call.1} parent=51 // pred_region
          #allocation12 [shape = 'u32[6]{0}', space=smem, size = 0x18, scoped, tag = 'DMA stride descriptor']
          %s577 = sand.u32 %s108, 1
          %s578 = scalar_lea.sflag [#allocation4], %s577
          %s579 = sand.u32 %s108, 1
          %s580 = smul.addr %s579, 112
          %s581 = scalar_lea.vmem [#allocation8], %s580
          %s582 = smul.u32 2, %s25
          %584 = vsyncadd %s578, 0
          %s585 = smul.addr %s582, 2
          %s586 = smul.addr %s585, 4
          %s587 = scalar_lea.hbm %s3, %s586
          %s589 = sshll.u32 1, 14
          %s590 = sxor.u32 4294967295, %s589
          %s592 = sld [smem:[#allocation0]]
          %s593 = sadd.s32 2, %s592
          %s595 = sshll.u32 7, 26
          %s596 = sxor.u32 4294967295, %s595
          %s597 = sand.u32 0, %s596
          %s598 = sshll.u32 %s593, 26
          %s599 = sor.u32 %s597, %s598
          %s600 = sshll.u32 %s587, 4
          %s601 = int_to_ptr.hbm [resolvable:$true] %s600
          %s602 = sshll.u32 %s581, 4
          %s603 = int_to_ptr.vmem [resolvable:$true] %s602
          %609 = sst [smem:[#allocation12]] 512
          %s610 = scalar_lea.smem [#allocation12], 1
          %611 = sst [smem:[%s610]] 256
          %s612 = scalar_lea.smem [#allocation12], 2
          %613 = sst [smem:[%s612]] 2
          %s614 = scalar_lea.smem [#allocation12], 3
          %615 = sst [smem:[%s614]] 128
          %s616 = scalar_lea.smem [#allocation12], 4
          %617 = sst [smem:[%s616]] 128
          %s618 = scalar_lea.smem [#allocation12], 5
          %619 = sst [smem:[%s618]] 8
          %621 = dma.general %s601, 1792, %s603, %s578, [#allocation11], [#allocation12], %s599, 0
        $region132: #{tpu_custom_call.1} parent=51 // pred_fallthru
          _
      $region52: #{tpu_custom_call.1} parent=5 // pred_fallthru
        _
      %p622 = scmp.le.s32.totalorder 1, %s25
      %p623 = scmp.lt.s32.totalorder %s25, 3
      %p624 = pnand %p622, %p623
      %p625 = pneg %p624
      // Predicated region
      $region133: #{tpu_custom_call.1} parent=5 // pred_check
        _
      $region134: #{tpu_custom_call.1} parent=5 // pred_check_branch
        %627 = sbr.rel (%p624) target = $region136
      $region135: #{tpu_custom_call.1} parent=5 // pred_region
        %s628 = ssub.s32 %s25, 1
        // Predicated region
        $region137: #{tpu_custom_call.1} parent=135 // pred_check
          %p629 = pneg %p46
        $region138: #{tpu_custom_call.1} parent=135 // pred_check_branch
          %631 = sbr.rel (%p629) target = $region140
        $region139: #{tpu_custom_call.1} parent=135 // pred_region
          %633 = dma.done [#allocation5], 16
        $region140: #{tpu_custom_call.1} parent=135 // pred_fallthru
          _
        %s634 = sand.u32 %s59, 1
        %s635 = sand.u32 %s59, 1
        %s636 = smul.addr %s635, 112
        %s637 = scalar_lea.vmem [#allocation6], %s636
        // Predicated region
        $region141: #{tpu_custom_call.1} parent=135 // pred_check
          %p638 = pneg %p72
        $region142: #{tpu_custom_call.1} parent=135 // pred_check_branch
          %640 = sbr.rel (%p638) target = $region144
        $region143: #{tpu_custom_call.1} parent=135 // pred_region
          _
        $region144: #{tpu_custom_call.1} parent=135 // pred_fallthru
          _
        %s641 = sand.u32 %s85, 1
        %s642 = sand.u32 %s85, 1
        %s643 = smul.addr %s642, 112
        %s644 = scalar_lea.vmem [#allocation7], %s643
        // Predicated region
        $region145: #{tpu_custom_call.1} parent=135 // pred_check
          %p645 = pneg %p98
        $region146: #{tpu_custom_call.1} parent=135 // pred_check_branch
          %647 = sbr.rel (%p645) target = $region148
        $region147: #{tpu_custom_call.1} parent=135 // pred_region
          _
        $region148: #{tpu_custom_call.1} parent=135 // pred_fallthru
          _
        %s648 = sand.u32 %s111, 1
        %s649 = scalar_lea.sflag [#allocation4], %s648
        %s650 = sand.u32 %s111, 1
        %s651 = smul.addr %s650, 112
        %s652 = scalar_lea.vmem [#allocation8], %s651
        // Predicated region
        $region149: #{tpu_custom_call.1} parent=135 // pred_check
          %p653 = pneg %p124
        $region150: #{tpu_custom_call.1} parent=135 // pred_check_branch
          %655 = sbr.rel (%p653) target = $region152
        $region151: #{tpu_custom_call.1} parent=135 // pred_region
          %657 = dma.done %s649, 1792
        $region152: #{tpu_custom_call.1} parent=135 // pred_fallthru
          _
        // Predicated region
        $region153: #{tpu_custom_call.1} parent=135 // pred_check
          %p658 = pneg %p145
        $region154: #{tpu_custom_call.1} parent=135 // pred_check_branch
          %660 = sbr.rel (%p658) target = $region156
        $region155: #{tpu_custom_call.1} parent=135 // pred_region
          %662 = dma.done [#allocation10], 19200
        $region156: #{tpu_custom_call.1} parent=135 // pred_fallthru
          _
        %663 = sfence
        %p664 = pneg %p46
        %p665 = pneg %p43
        %s666 = sand.u32 %s59, 1
        %s667 = sand.u32 %s59, 1
        %s668 = smul.addr %s667, 112
        %s669 = scalar_lea.vmem [#allocation6], %s668
        %p670 = pneg %p72
        %p671 = pneg %p69
        %s672 = sand.u32 %s85, 1
        %s673 = sand.u32 %s85, 1
        %s674 = smul.addr %s673, 112
        %s675 = scalar_lea.vmem [#allocation7], %s674
        %p676 = pneg %p98
        %p677 = pneg %p95
        %s678 = sand.u32 %s111, 1
        %s679 = scalar_lea.sflag [#allocation4], %s678
        %s680 = sand.u32 %s111, 1
        %s681 = smul.addr %s680, 112
        %s682 = scalar_lea.vmem [#allocation8], %s681
        %p683 = pneg %p124
        %p684 = pneg %p121
        %p685 = pneg %p145
        %p686 = pneg %p142
        %p687 = pneg %p166
        %p688 = pneg %p163
        %p689 = pneg %p187
        %p690 = pneg %p184
        %p691 = pneg %p208
        %p692 = pneg %p205
        %p693 = pneg %p229
        %p694 = pneg %p226
        %p695 = pneg %p250
        %p696 = pneg %p247
        %p697 = pneg %p271
        %p698 = pneg %p268
        %p699 = pneg %p292
        %p700 = pneg %p289
        %p701 = pneg %p318
        %p702 = pneg %p315
        %s703 = smul.u32 2, %s30
        %p704 = scmp.lt.s32.totalorder %s703, 3
        %s705 = scalar_select %p704, %s703, 3
        %s706 = smul.addr %s705, 8
        %s707 = scalar_lea.vmem %s12, %s706
        %s708 = smul.u32 2, %s30
        %s709 = smul.u32 2, %s30
        %s710 = smul.u32 2, %s30
        %s711 = smul.u32 2, %s30
        %p712 = scmp.lt.s32.totalorder %s711, 3
        %s713 = scalar_select %p712, %s711, 3
        %s714 = smul.addr %s713, 8
        %s715 = scalar_lea.vmem %s12, %s714
        %s716 = smul.u32 2, %s30
        %s717 = sld [smem:[#allocation3]]
        %v718 = vld [vmem:[%s637] sm:$0xff]
        %v719 = vld [vmem:[%s637 + $0x8] sm:$0xff]
        %v720 = vunpack.c.l.bf16 %v718
        %v721 = vunpack.c.h.bf16 %v718
        %v722 = vunpack.c.l.bf16 %v719
        %v723 = vunpack.c.h.bf16 %v719
        %v724 = vstv %s717
        %v725 = vmul.f32 %v724, %v720
        %v726 = vmul.f32 %v724, %v721
        %v727 = vmul.f32 %v724, %v722
        %v728 = vmul.f32 %v724, %v723
        %s729 = sld [smem:[#allocation3 + $0x1]]
        %s730 = scalar_lea.vmem %s637, 16 [#allocation6]
        %v731 = vld [vmem:[%s730] sm:$0xff]
        %v732 = vld [vmem:[%s730 + $0x8] sm:$0xff]
        %v733 = vunpack.c.l.bf16 %v731
        %v734 = vunpack.c.h.bf16 %v731
        %v735 = vunpack.c.l.bf16 %v732
        %v736 = vunpack.c.h.bf16 %v732
        %v737 = vstv %s729
        %v738 = vmul.f32 %v737, %v733
        %v739 = vmul.f32 %v737, %v734
        %v740 = vmul.f32 %v737, %v735
        %v741 = vmul.f32 %v737, %v736
        %v742 = vadd.f32 %v725, %v738
        %v743 = vadd.f32 %v726, %v739
        %v744 = vadd.f32 %v727, %v740
        %v745 = vadd.f32 %v728, %v741
        %s746 = sld [smem:[#allocation3 + $0x2]]
        %s747 = scalar_lea.vmem %s637, 32 [#allocation6]
        %v748 = vld [vmem:[%s747] sm:$0xff]
        %v749 = vld [vmem:[%s747 + $0x8] sm:$0xff]
        %v750 = vunpack.c.l.bf16 %v748
        %v751 = vunpack.c.h.bf16 %v748
        %v752 = vunpack.c.l.bf16 %v749
        %v753 = vunpack.c.h.bf16 %v749
        %v754 = vstv %s746
        %v755 = vmul.f32 %v754, %v750
        %v756 = vmul.f32 %v754, %v751
        %v757 = vmul.f32 %v754, %v752
        %v758 = vmul.f32 %v754, %v753
        %v759 = vadd.f32 %v742, %v755
        %v760 = vadd.f32 %v743, %v756
        %v761 = vadd.f32 %v744, %v757
        %v762 = vadd.f32 %v745, %v758
        %s763 = sld [smem:[#allocation3 + $0x3]]
        %s764 = scalar_lea.vmem %s637, 48 [#allocation6]
        %v765 = vld [vmem:[%s764] sm:$0xff]
        %v766 = vld [vmem:[%s764 + $0x8] sm:$0xff]
        %v767 = vunpack.c.l.bf16 %v765
        %v768 = vunpack.c.h.bf16 %v765
        %v769 = vunpack.c.l.bf16 %v766
        %v770 = vunpack.c.h.bf16 %v766
        %v771 = vstv %s763
        %v772 = vmul.f32 %v771, %v767
        %v773 = vmul.f32 %v771, %v768
        %v774 = vmul.f32 %v771, %v769
        %v775 = vmul.f32 %v771, %v770
        %v776 = vadd.f32 %v759, %v772
        %v777 = vadd.f32 %v760, %v773
        %v778 = vadd.f32 %v761, %v774
        %v779 = vadd.f32 %v762, %v775
        %s780 = sld [smem:[#allocation3 + $0x4]]
        %s781 = scalar_lea.vmem %s637, 64 [#allocation6]
        %v782 = vld [vmem:[%s781] sm:$0xff]
        %v783 = vld [vmem:[%s781 + $0x8] sm:$0xff]
        %v784 = vunpack.c.l.bf16 %v782
        %v785 = vunpack.c.h.bf16 %v782
        %v786 = vunpack.c.l.bf16 %v783
        %v787 = vunpack.c.h.bf16 %v783
        %v788 = vstv %s780
        %v789 = vmul.f32 %v788, %v784
        %v790 = vmul.f32 %v788, %v785
        %v791 = vmul.f32 %v788, %v786
        %v792 = vmul.f32 %v788, %v787
        %v793 = vadd.f32 %v776, %v789
        %v794 = vadd.f32 %v777, %v790
        %v795 = vadd.f32 %v778, %v791
        %v796 = vadd.f32 %v779, %v792
        %s797 = sld [smem:[#allocation3 + $0x5]]
        %s798 = scalar_lea.vmem %s637, 80 [#allocation6]
        %v799 = vld [vmem:[%s798] sm:$0xff]
        %v800 = vld [vmem:[%s798 + $0x8] sm:$0xff]
        %v801 = vunpack.c.l.bf16 %v799
        %v802 = vunpack.c.h.bf16 %v799
        %v803 = vunpack.c.l.bf16 %v800
        %v804 = vunpack.c.h.bf16 %v800
        %v805 = vstv %s797
        %v806 = vmul.f32 %v805, %v801
        %v807 = vmul.f32 %v805, %v802
        %v808 = vmul.f32 %v805, %v803
        %v809 = vmul.f32 %v805, %v804
        %v810 = vadd.f32 %v793, %v806
        %v811 = vadd.f32 %v794, %v807
        %v812 = vadd.f32 %v795, %v808
        %v813 = vadd.f32 %v796, %v809
        %s814 = sld [smem:[#allocation3 + $0x6]]
        %s815 = scalar_lea.vmem %s637, 96 [#allocation6]
        %v816 = vld [vmem:[%s815] sm:$0xff]
        %v817 = vld [vmem:[%s815 + $0x8] sm:$0xff]
        %v818 = vunpack.c.l.bf16 %v816
        %v819 = vunpack.c.h.bf16 %v816
        %v820 = vunpack.c.l.bf16 %v817
        %v821 = vunpack.c.h.bf16 %v817
        %v822 = vstv %s814
        %v823 = vmul.f32 %v822, %v818
        %v824 = vmul.f32 %v822, %v819
        %v825 = vmul.f32 %v822, %v820
        %v826 = vmul.f32 %v822, %v821
        %v827 = vadd.f32 %v810, %v823
        %v828 = vadd.f32 %v811, %v824
        %v829 = vadd.f32 %v812, %v825
        %v830 = vadd.f32 %v813, %v826
        %v831 = vld [vmem:[%s644] sm:$0xff]
        %v832 = vld [vmem:[%s644 + $0x8] sm:$0xff]
        %v833 = vunpack.c.l.bf16 %v831
        %v834 = vunpack.c.h.bf16 %v831
        %v835 = vunpack.c.l.bf16 %v832
        %v836 = vunpack.c.h.bf16 %v832
        %v837 = vmul.f32 %v724, %v833
        %v838 = vmul.f32 %v724, %v834
        %v839 = vmul.f32 %v724, %v835
        %v840 = vmul.f32 %v724, %v836
        %s841 = scalar_lea.vmem %s644, 16 [#allocation7]
        %v842 = vld [vmem:[%s841] sm:$0xff]
        %v843 = vld [vmem:[%s841 + $0x8] sm:$0xff]
        %v844 = vunpack.c.l.bf16 %v842
        %v845 = vunpack.c.h.bf16 %v842
        %v846 = vunpack.c.l.bf16 %v843
        %v847 = vunpack.c.h.bf16 %v843
        %v848 = vmul.f32 %v737, %v844
        %v849 = vmul.f32 %v737, %v845
        %v850 = vmul.f32 %v737, %v846
        %v851 = vmul.f32 %v737, %v847
        %v852 = vadd.f32 %v837, %v848
        %v853 = vadd.f32 %v838, %v849
        %v854 = vadd.f32 %v839, %v850
        %v855 = vadd.f32 %v840, %v851
        %s856 = scalar_lea.vmem %s644, 32 [#allocation7]
        %v857 = vld [vmem:[%s856] sm:$0xff]
        %v858 = vld [vmem:[%s856 + $0x8] sm:$0xff]
        %v859 = vunpack.c.l.bf16 %v857
        %v860 = vunpack.c.h.bf16 %v857
        %v861 = vunpack.c.l.bf16 %v858
        %v862 = vunpack.c.h.bf16 %v858
        %v863 = vmul.f32 %v754, %v859
        %v864 = vmul.f32 %v754, %v860
        %v865 = vmul.f32 %v754, %v861
        %v866 = vmul.f32 %v754, %v862
        %v867 = vadd.f32 %v852, %v863
        %v868 = vadd.f32 %v853, %v864
        %v869 = vadd.f32 %v854, %v865
        %v870 = vadd.f32 %v855, %v866
        %s871 = scalar_lea.vmem %s644, 48 [#allocation7]
        %v872 = vld [vmem:[%s871] sm:$0xff]
        %v873 = vld [vmem:[%s871 + $0x8] sm:$0xff]
        %v874 = vunpack.c.l.bf16 %v872
        %v875 = vunpack.c.h.bf16 %v872
        %v876 = vunpack.c.l.bf16 %v873
        %v877 = vunpack.c.h.bf16 %v873
        %v878 = vmul.f32 %v771, %v874
        %v879 = vmul.f32 %v771, %v875
        %v880 = vmul.f32 %v771, %v876
        %v881 = vmul.f32 %v771, %v877
        %v882 = vadd.f32 %v867, %v878
        %v883 = vadd.f32 %v868, %v879
        %v884 = vadd.f32 %v869, %v880
        %v885 = vadd.f32 %v870, %v881
        %s886 = scalar_lea.vmem %s644, 64 [#allocation7]
        %v887 = vld [vmem:[%s886] sm:$0xff]
        %v888 = vld [vmem:[%s886 + $0x8] sm:$0xff]
        %v889 = vunpack.c.l.bf16 %v887
        %v890 = vunpack.c.h.bf16 %v887
        %v891 = vunpack.c.l.bf16 %v888
        %v892 = vunpack.c.h.bf16 %v888
        %v893 = vmul.f32 %v788, %v889
        %v894 = vmul.f32 %v788, %v890
        %v895 = vmul.f32 %v788, %v891
        %v896 = vmul.f32 %v788, %v892
        %v897 = vadd.f32 %v882, %v893
        %v898 = vadd.f32 %v883, %v894
        %v899 = vadd.f32 %v884, %v895
        %v900 = vadd.f32 %v885, %v896
        %s901 = scalar_lea.vmem %s644, 80 [#allocation7]
        %v902 = vld [vmem:[%s901] sm:$0xff]
        %v903 = vld [vmem:[%s901 + $0x8] sm:$0xff]
        %v904 = vunpack.c.l.bf16 %v902
        %v905 = vunpack.c.h.bf16 %v902
        %v906 = vunpack.c.l.bf16 %v903
        %v907 = vunpack.c.h.bf16 %v903
        %v908 = vmul.f32 %v805, %v904
        %v909 = vmul.f32 %v805, %v905
        %v910 = vmul.f32 %v805, %v906
        %v911 = vmul.f32 %v805, %v907
        %v912 = vadd.f32 %v897, %v908
        %v913 = vadd.f32 %v898, %v909
        %v914 = vadd.f32 %v899, %v910
        %v915 = vadd.f32 %v900, %v911
        %s916 = scalar_lea.vmem %s644, 96 [#allocation7]
        %v917 = vld [vmem:[%s916] sm:$0xff]
        %v918 = vld [vmem:[%s916 + $0x8] sm:$0xff]
        %v919 = vunpack.c.l.bf16 %v917
        %v920 = vunpack.c.h.bf16 %v917
        %v921 = vunpack.c.l.bf16 %v918
        %v922 = vunpack.c.h.bf16 %v918
        %v923 = vmul.f32 %v822, %v919
        %v924 = vmul.f32 %v822, %v920
        %v925 = vmul.f32 %v822, %v921
        %v926 = vmul.f32 %v822, %v922
        %v927 = vadd.f32 %v912, %v923
        %v928 = vadd.f32 %v913, %v924
        %v929 = vadd.f32 %v914, %v925
        %v930 = vadd.f32 %v915, %v926
        %v931 = vld [vmem:[%s652] sm:$0xff]
        %v932 = vld [vmem:[%s652 + $0x8] sm:$0xff]
        %v933 = vunpack.c.l.bf16 %v931
        %v934 = vunpack.c.h.bf16 %v931
        %v935 = vunpack.c.l.bf16 %v932
        %v936 = vunpack.c.h.bf16 %v932
        %v937 = vmul.f32 %v724, %v933
        %v938 = vmul.f32 %v724, %v934
        %v939 = vmul.f32 %v724, %v935
        %v940 = vmul.f32 %v724, %v936
        %s941 = scalar_lea.vmem %s652, 16 [#allocation8]
        %v942 = vld [vmem:[%s941] sm:$0xff]
        %v943 = vld [vmem:[%s941 + $0x8] sm:$0xff]
        %v944 = vunpack.c.l.bf16 %v942
        %v945 = vunpack.c.h.bf16 %v942
        %v946 = vunpack.c.l.bf16 %v943
        %v947 = vunpack.c.h.bf16 %v943
        %v948 = vmul.f32 %v737, %v944
        %v949 = vmul.f32 %v737, %v945
        %v950 = vmul.f32 %v737, %v946
        %v951 = vmul.f32 %v737, %v947
        %v952 = vadd.f32 %v937, %v948
        %v953 = vadd.f32 %v938, %v949
        %v954 = vadd.f32 %v939, %v950
        %v955 = vadd.f32 %v940, %v951
        %s956 = scalar_lea.vmem %s652, 32 [#allocation8]
        %v957 = vld [vmem:[%s956] sm:$0xff]
        %v958 = vld [vmem:[%s956 + $0x8] sm:$0xff]
        %v959 = vunpack.c.l.bf16 %v957
        %v960 = vunpack.c.h.bf16 %v957
        %v961 = vunpack.c.l.bf16 %v958
        %v962 = vunpack.c.h.bf16 %v958
        %v963 = vmul.f32 %v754, %v959
        %v964 = vmul.f32 %v754, %v960
        %v965 = vmul.f32 %v754, %v961
        %v966 = vmul.f32 %v754, %v962
        %v967 = vadd.f32 %v952, %v963
        %v968 = vadd.f32 %v953, %v964
        %v969 = vadd.f32 %v954, %v965
        %v970 = vadd.f32 %v955, %v966
        %s971 = scalar_lea.vmem %s652, 48 [#allocation8]
        %v972 = vld [vmem:[%s971] sm:$0xff]
        %v973 = vld [vmem:[%s971 + $0x8] sm:$0xff]
        %v974 = vunpack.c.l.bf16 %v972
        %v975 = vunpack.c.h.bf16 %v972
        %v976 = vunpack.c.l.bf16 %v973
        %v977 = vunpack.c.h.bf16 %v973
        %v978 = vmul.f32 %v771, %v974
        %v979 = vmul.f32 %v771, %v975
        %v980 = vmul.f32 %v771, %v976
        %v981 = vmul.f32 %v771, %v977
        %v982 = vadd.f32 %v967, %v978
        %v983 = vadd.f32 %v968, %v979
        %v984 = vadd.f32 %v969, %v980
        %v985 = vadd.f32 %v970, %v981
        %s986 = scalar_lea.vmem %s652, 64 [#allocation8]
        %v987 = vld [vmem:[%s986] sm:$0xff]
        %v988 = vld [vmem:[%s986 + $0x8] sm:$0xff]
        %v989 = vunpack.c.l.bf16 %v987
        %v990 = vunpack.c.h.bf16 %v987
        %v991 = vunpack.c.l.bf16 %v988
        %v992 = vunpack.c.h.bf16 %v988
        %v993 = vmul.f32 %v788, %v989
        %v994 = vmul.f32 %v788, %v990
        %v995 = vmul.f32 %v788, %v991
        %v996 = vmul.f32 %v788, %v992
        %v997 = vadd.f32 %v982, %v993
        %v998 = vadd.f32 %v983, %v994
        %v999 = vadd.f32 %v984, %v995
        %v1000 = vadd.f32 %v985, %v996
        %s1001 = scalar_lea.vmem %s652, 80 [#allocation8]
        %v1002 = vld [vmem:[%s1001] sm:$0xff]
        %v1003 = vld [vmem:[%s1001 + $0x8] sm:$0xff]
        %v1004 = vunpack.c.l.bf16 %v1002
        %v1005 = vunpack.c.h.bf16 %v1002
        %v1006 = vunpack.c.l.bf16 %v1003
        %v1007 = vunpack.c.h.bf16 %v1003
        %v1008 = vmul.f32 %v805, %v1004
        %v1009 = vmul.f32 %v805, %v1005
        %v1010 = vmul.f32 %v805, %v1006
        %v1011 = vmul.f32 %v805, %v1007
        %v1012 = vadd.f32 %v997, %v1008
        %v1013 = vadd.f32 %v998, %v1009
        %v1014 = vadd.f32 %v999, %v1010
        %v1015 = vadd.f32 %v1000, %v1011
        %s1016 = scalar_lea.vmem %s652, 96 [#allocation8]
        %v1017 = vld [vmem:[%s1016] sm:$0xff]
        %v1018 = vld [vmem:[%s1016 + $0x8] sm:$0xff]
        %v1019 = vunpack.c.l.bf16 %v1017
        %v1020 = vunpack.c.h.bf16 %v1017
        %v1021 = vunpack.c.l.bf16 %v1018
        %v1022 = vunpack.c.h.bf16 %v1018
        %v1023 = vmul.f32 %v822, %v1019
        %v1024 = vmul.f32 %v822, %v1020
        %v1025 = vmul.f32 %v822, %v1021
        %v1026 = vmul.f32 %v822, %v1022
        %v1027 = vadd.f32 %v1012, %v1023
        %v1028 = vadd.f32 %v1013, %v1024
        %v1029 = vadd.f32 %v1014, %v1025
        %v1030 = vadd.f32 %v1015, %v1026
        %v1031 = vld [vmem:[#allocation9] sm:$0xff]
        %v1032 = vld [vmem:[#allocation9 + $0x8] sm:$0xff]
        %v1033 = vld [vmem:[#allocation9 + $0x10] sm:$0xff]
        %v1034 = vld [vmem:[#allocation9 + $0x18] sm:$0xff]
        %v1035 = vld [vmem:[#allocation9 + $0x20] sm:$0xff]
        %v1036 = vld [vmem:[#allocation9 + $0x28] sm:$0xff]
        %v1037 = vld [vmem:[#allocation9 + $0x30] sm:$0xff]
        %v1038 = vld [vmem:[#allocation9 + $0x38] sm:$0xff]
        %v1039 = vld [vmem:[#allocation9 + $0x40] sm:$0xff]
        %v1040 = vld [vmem:[#allocation9 + $0x48] sm:$0xff]
        %v1041 = vld [vmem:[#allocation9 + $0x50] sm:$0xff]
        %v1042 = vld [vmem:[#allocation9 + $0x58] sm:$0xff]
        %v1043 = vld [vmem:[#allocation9 + $0x60] sm:$0xff]
        %v1044 = vld [vmem:[#allocation9 + $0x68] sm:$0xff]
        %v1045 = vld [vmem:[#allocation9 + $0x70] sm:$0xff]
        %v1046 = vld [vmem:[#allocation9 + $0x78] sm:$0xff]
        %v1047 = vld [vmem:[#allocation9 + $0x80] sm:$0xff]
        %v1048 = vld [vmem:[#allocation9 + $0x88] sm:$0xff]
        %v1049 = vld [vmem:[#allocation9 + $0x90] sm:$0xff]
        %v1050 = vld [vmem:[#allocation9 + $0x98] sm:$0xff]
        %v1051 = vld [vmem:[#allocation9 + $0xa0] sm:$0xff]
        %v1052 = vld [vmem:[#allocation9 + $0xa8] sm:$0xff]
        %v1053 = vld [vmem:[#allocation9 + $0xb0] sm:$0xff]
        %v1054 = vld [vmem:[#allocation9 + $0xb8] sm:$0xff]
        %v1055 = vld [vmem:[#allocation9 + $0xc0] sm:$0xff]
        %v1056 = vld [vmem:[#allocation9 + $0xc8] sm:$0xff]
        %v1057 = vld [vmem:[#allocation9 + $0xd0] sm:$0xff]
        %v1058 = vld [vmem:[#allocation9 + $0xd8] sm:$0xff]
        %v1059 = vld [vmem:[#allocation9 + $0xe0] sm:$0xff]
        %v1060 = vld [vmem:[#allocation9 + $0xe8] sm:$0xff]
        %v1061 = vld [vmem:[#allocation9 + $0xf0] sm:$0xff]
        %v1062 = vld [vmem:[#allocation9 + $0xf8] sm:$0xff]
        %v1063 = vld [vmem:[#allocation9 + $0x100] sm:$0xff]
        %v1064 = vld [vmem:[#allocation9 + $0x108] sm:$0xff]
        %v1065 = vld [vmem:[#allocation9 + $0x110] sm:$0xff]
        %v1066 = vld [vmem:[#allocation9 + $0x118] sm:$0xff]
        %v1067 = vld [vmem:[#allocation9 + $0x120] sm:$0xff]
        %v1068 = vld [vmem:[#allocation9 + $0x128] sm:$0xff]
        %v1069 = vld [vmem:[#allocation9 + $0x130] sm:$0xff]
        %v1070 = vld [vmem:[#allocation9 + $0x138] sm:$0xff]
        %v1071 = vld [vmem:[#allocation9 + $0x140] sm:$0xff]
        %v1072 = vld [vmem:[#allocation9 + $0x148] sm:$0xff]
        %v1073 = vld [vmem:[#allocation9 + $0x150] sm:$0xff]
        %v1074 = vld [vmem:[#allocation9 + $0x158] sm:$0xff]
        %v1075 = vld [vmem:[#allocation9 + $0x160] sm:$0xff]
        %v1076 = vld [vmem:[#allocation9 + $0x168] sm:$0xff]
        %v1077 = vld [vmem:[#allocation9 + $0x170] sm:$0xff]
        %v1078 = vld [vmem:[#allocation9 + $0x178] sm:$0xff]
        %v1079 = vld [vmem:[#allocation9 + $0x180] sm:$0xff]
        %v1080 = vld [vmem:[#allocation9 + $0x188] sm:$0xff]
        %v1081 = vld [vmem:[#allocation9 + $0x190] sm:$0xff]
        %v1082 = vld [vmem:[#allocation9 + $0x198] sm:$0xff]
        %v1083 = vld [vmem:[#allocation9 + $0x1a0] sm:$0xff]
        %v1084 = vld [vmem:[#allocation9 + $0x1a8] sm:$0xff]
        %v1085 = vld [vmem:[#allocation9 + $0x1b0] sm:$0xff]
        %v1086 = vld [vmem:[#allocation9 + $0x1b8] sm:$0xff]
        %v1087 = vld [vmem:[#allocation9 + $0x1c0] sm:$0xff]
        %v1088 = vld [vmem:[#allocation9 + $0x1c8] sm:$0xff]
        %v1089 = vld [vmem:[#allocation9 + $0x1d0] sm:$0xff]
        %v1090 = vld [vmem:[#allocation9 + $0x1d8] sm:$0xff]
        %v1091 = vld [vmem:[#allocation9 + $0x1e0] sm:$0xff]
        %v1092 = vld [vmem:[#allocation9 + $0x1e8] sm:$0xff]
        %v1093 = vld [vmem:[#allocation9 + $0x1f0] sm:$0xff]
        %v1094 = vld [vmem:[#allocation9 + $0x1f8] sm:$0xff]
        %v1095 = vld [vmem:[#allocation9 + $0x200] sm:$0xff]
        %v1096 = vld [vmem:[#allocation9 + $0x208] sm:$0xff]
        %v1097 = vld [vmem:[#allocation9 + $0x210] sm:$0xff]
        %v1098 = vld [vmem:[#allocation9 + $0x218] sm:$0xff]
        %v1099 = vld [vmem:[#allocation9 + $0x220] sm:$0xff]
        %v1100 = vld [vmem:[#allocation9 + $0x228] sm:$0xff]
        %v1101 = vld [vmem:[#allocation9 + $0x230] sm:$0xff]
        %v1102 = vld [vmem:[#allocation9 + $0x238] sm:$0xff]
        %v1103 = vld [vmem:[#allocation9 + $0x240] sm:$0xff]
        %v1104 = vld [vmem:[#allocation9 + $0x248] sm:$0xff]
        %v1105 = vld [vmem:[#allocation9 + $0x250] sm:$0xff]
        %v1106 = vld [vmem:[#allocation9 + $0x258] sm:$0xff]
        %v1107 = vld [vmem:[#allocation9 + $0x260] sm:$0xff]
        %v1108 = vld [vmem:[#allocation9 + $0x268] sm:$0xff]
        %v1109 = vld [vmem:[#allocation9 + $0x270] sm:$0xff]
        %v1110 = vld [vmem:[#allocation9 + $0x278] sm:$0xff]
        %v1111 = vld [vmem:[#allocation9 + $0x280] sm:$0xff]
        %v1112 = vld [vmem:[#allocation9 + $0x288] sm:$0xff]
        %v1113 = vld [vmem:[#allocation9 + $0x290] sm:$0xff]
        %v1114 = vld [vmem:[#allocation9 + $0x298] sm:$0xff]
        %v1115 = vld [vmem:[#allocation9 + $0x2a0] sm:$0xff]
        %v1116 = vld [vmem:[#allocation9 + $0x2a8] sm:$0xff]
        %v1117 = vld [vmem:[#allocation9 + $0x2b0] sm:$0xff]
        %v1118 = vld [vmem:[#allocation9 + $0x2b8] sm:$0xff]
        %v1119 = vld [vmem:[#allocation9 + $0x2c0] sm:$0xff]
        %v1120 = vld [vmem:[#allocation9 + $0x2c8] sm:$0xff]
        %v1121 = vld [vmem:[#allocation9 + $0x2d0] sm:$0xff]
        %v1122 = vld [vmem:[#allocation9 + $0x2d8] sm:$0xff]
        %v1123 = vld [vmem:[#allocation9 + $0x2e0] sm:$0xff]
        %v1124 = vld [vmem:[#allocation9 + $0x2e8] sm:$0xff]
        %v1125 = vld [vmem:[#allocation9 + $0x2f0] sm:$0xff]
        %v1126 = vld [vmem:[#allocation9 + $0x2f8] sm:$0xff]
        %v1127 = vld [vmem:[#allocation9 + $0x300] sm:$0xff]
        %v1128 = vld [vmem:[#allocation9 + $0x308] sm:$0xff]
        %v1129 = vld [vmem:[#allocation9 + $0x310] sm:$0xff]
        %v1130 = vld [vmem:[#allocation9 + $0x318] sm:$0xff]
        %vm1131 = vcmask 588800
        %v1133 = vsel %vm1131, %v928, 0
        %v1136 = vsel %vm1131, %v930, 0
        %1138 = vmatpush.msra.mxu0 %v1111
        %1139 = vmatpush.msra.mxu0 %v1109
        %1140 = vmatpush.msra.mxu0 %v1107
        %1141 = vmatpush.msra.mxu0 %v1105
        %1142 = vmatpush.msra.mxu0 %v1103
        %1143 = vmatpush.msra.mxu0 %v1101
        %1144 = vmatpush.msra.mxu0 %v1099
        %1145 = vmatpush.msra.mxu0 %v1097
        %1146 = vmatpush.msra.mxu0 %v1095
        %1147 = vmatpush.msra.mxu0 %v1093
        %1148 = vmatpush.msra.mxu0 %v1091
        %1149 = vmatpush.msra.mxu0 %v1089
        %1150 = vmatpush.msra.mxu0 %v1087
        %1151 = vmatpush.msra.mxu0 %v1085
        %1152 = vmatpush.msra.mxu0 %v1083
        %1153 = vmatpush.msra.mxu0 %v1081
        %1154 = vmatmul.f32.gmra.mxu0 %v927
        %v1155 = vpop.f32.mrf.mxu0
        %v1156 = vadd.f32 0.0, %v1155
        %1157 = vmatmul.f32.gmra.mxu0 %v929
        %v1158 = vpop.f32.mrf.mxu0
        %v1159 = vadd.f32 0.0, %v1158
        %1160 = vdwg.mxu0
        %1161 = vmatpush.msra.mxu0 0.0
        %1162 = vmatpush.msra.mxu0 0.0
        %1163 = vmatpush.msra.mxu0 0.0
        %1164 = vmatpush.msra.mxu0 0.0
        %1165 = vmatpush.msra.mxu0 0.0
        %1166 = vmatpush.msra.mxu0 0.0
        %1167 = vmatpush.msra.mxu0 0.0
        %1168 = vmatpush.msra.mxu0 %v1129
        %1169 = vmatpush.msra.mxu0 %v1127
        %1170 = vmatpush.msra.mxu0 %v1125
        %1171 = vmatpush.msra.mxu0 %v1123
        %1172 = vmatpush.msra.mxu0 %v1121
        %1173 = vmatpush.msra.mxu0 %v1119
        %1174 = vmatpush.msra.mxu0 %v1117
        %1175 = vmatpush.msra.mxu0 %v1115
        %1176 = vmatpush.msra.mxu0 %v1113
        %1177 = vmatmul.f32.gmra.mxu0 %v1133
        %v1178 = vpop.f32.mrf.mxu0
        %v1179 = vadd.f32 %v1156, %v1178
        %1180 = vmatmul.f32.gmra.mxu0 %v1136
        %v1181 = vpop.f32.mrf.mxu0
        %v1182 = vadd.f32 %v1159, %v1181
        %1183 = vdwg.mxu0
        %1184 = vmatpush.msra.mxu0 %v1112
        %1185 = vmatpush.msra.mxu0 %v1110
        %1186 = vmatpush.msra.mxu0 %v1108
        %1187 = vmatpush.msra.mxu0 %v1106
        %1188 = vmatpush.msra.mxu0 %v1104
        %1189 = vmatpush.msra.mxu0 %v1102
        %1190 = vmatpush.msra.mxu0 %v1100
        %1191 = vmatpush.msra.mxu0 %v1098
        %1192 = vmatpush.msra.mxu0 %v1096
        %1193 = vmatpush.msra.mxu0 %v1094
        %1194 = vmatpush.msra.mxu0 %v1092
        %1195 = vmatpush.msra.mxu0 %v1090
        %1196 = vmatpush.msra.mxu0 %v1088
        %1197 = vmatpush.msra.mxu0 %v1086
        %1198 = vmatpush.msra.mxu0 %v1084
        %1199 = vmatpush.msra.mxu0 %v1082
        %1200 = vmatmul.f32.gmra.mxu0 %v927
        %v1201 = vpop.f32.mrf.mxu0
        %v1202 = vadd.f32 0.0, %v1201
        %1203 = vmatmul.f32.gmra.mxu0 %v929
        %v1204 = vpop.f32.mrf.mxu0
        %v1205 = vadd.f32 0.0, %v1204
        %1206 = vdwg.mxu0
        %1207 = vmatpush.msra.mxu0 0.0
        %1208 = vmatpush.msra.mxu0 0.0
        %1209 = vmatpush.msra.mxu0 0.0
        %1210 = vmatpush.msra.mxu0 0.0
        %1211 = vmatpush.msra.mxu0 0.0
        %1212 = vmatpush.msra.mxu0 0.0
        %1213 = vmatpush.msra.mxu0 0.0
        %1214 = vmatpush.msra.mxu0 %v1130
        %1215 = vmatpush.msra.mxu0 %v1128
        %1216 = vmatpush.msra.mxu0 %v1126
        %1217 = vmatpush.msra.mxu0 %v1124
        %1218 = vmatpush.msra.mxu0 %v1122
        %1219 = vmatpush.msra.mxu0 %v1120
        %1220 = vmatpush.msra.mxu0 %v1118
        %1221 = vmatpush.msra.mxu0 %v1116
        %1222 = vmatpush.msra.mxu0 %v1114
        %1223 = vmatmul.f32.gmra.mxu0 %v1133
        %v1224 = vpop.f32.mrf.mxu0
        %v1225 = vadd.f32 %v1202, %v1224
        %1226 = vmatmul.f32.gmra.mxu0 %v1136
        %v1227 = vpop.f32.mrf.mxu0
        %v1228 = vadd.f32 %v1205, %v1227
        %1229 = vdwg.mxu0
        %v1231 = vsel %vm1131, %v828, 0
        %v1234 = vsel %vm1131, %v830, 0
        %1236 = vmatpush.msra.mxu0 %v1061
        %1237 = vmatpush.msra.mxu0 %v1059
        %1238 = vmatpush.msra.mxu0 %v1057
        %1239 = vmatpush.msra.mxu0 %v1055
        %1240 = vmatpush.msra.mxu0 %v1053
        %1241 = vmatpush.msra.mxu0 %v1051
        %1242 = vmatpush.msra.mxu0 %v1049
        %1243 = vmatpush.msra.mxu0 %v1047
        %1244 = vmatpush.msra.mxu0 %v1045
        %1245 = vmatpush.msra.mxu0 %v1043
        %1246 = vmatpush.msra.mxu0 %v1041
        %1247 = vmatpush.msra.mxu0 %v1039
        %1248 = vmatpush.msra.mxu0 %v1037
        %1249 = vmatpush.msra.mxu0 %v1035
        %1250 = vmatpush.msra.mxu0 %v1033
        %1251 = vmatpush.msra.mxu0 %v1031
        %1252 = vmatmul.f32.gmra.mxu0 %v827
        %v1253 = vpop.f32.mrf.mxu0
        %v1254 = vadd.f32 %v1179, %v1253
        %1255 = vmatmul.f32.gmra.mxu0 %v829
        %v1256 = vpop.f32.mrf.mxu0
        %v1257 = vadd.f32 %v1182, %v1256
        %1258 = vdwg.mxu0
        %1259 = vmatpush.msra.mxu0 0.0
        %1260 = vmatpush.msra.mxu0 0.0
        %1261 = vmatpush.msra.mxu0 0.0
        %1262 = vmatpush.msra.mxu0 0.0
        %1263 = vmatpush.msra.mxu0 0.0
        %1264 = vmatpush.msra.mxu0 0.0
        %1265 = vmatpush.msra.mxu0 0.0
        %1266 = vmatpush.msra.mxu0 %v1079
        %1267 = vmatpush.msra.mxu0 %v1077
        %1268 = vmatpush.msra.mxu0 %v1075
        %1269 = vmatpush.msra.mxu0 %v1073
        %1270 = vmatpush.msra.mxu0 %v1071
        %1271 = vmatpush.msra.mxu0 %v1069
        %1272 = vmatpush.msra.mxu0 %v1067
        %1273 = vmatpush.msra.mxu0 %v1065
        %1274 = vmatpush.msra.mxu0 %v1063
        %1275 = vmatmul.f32.gmra.mxu0 %v1231
        %v1276 = vpop.f32.mrf.mxu0
        %v1277 = vadd.f32 %v1254, %v1276
        %1278 = vmatmul.f32.gmra.mxu0 %v1234
        %v1279 = vpop.f32.mrf.mxu0
        %v1280 = vadd.f32 %v1257, %v1279
        %1281 = vdwg.mxu0
        %1282 = vmatpush.msra.mxu0 %v1062
        %1283 = vmatpush.msra.mxu0 %v1060
        %1284 = vmatpush.msra.mxu0 %v1058
        %1285 = vmatpush.msra.mxu0 %v1056
        %1286 = vmatpush.msra.mxu0 %v1054
        %1287 = vmatpush.msra.mxu0 %v1052
        %1288 = vmatpush.msra.mxu0 %v1050
        %1289 = vmatpush.msra.mxu0 %v1048
        %1290 = vmatpush.msra.mxu0 %v1046
        %1291 = vmatpush.msra.mxu0 %v1044
        %1292 = vmatpush.msra.mxu0 %v1042
        %1293 = vmatpush.msra.mxu0 %v1040
        %1294 = vmatpush.msra.mxu0 %v1038
        %1295 = vmatpush.msra.mxu0 %v1036
        %1296 = vmatpush.msra.mxu0 %v1034
        %1297 = vmatpush.msra.mxu0 %v1032
        %1298 = vmatmul.f32.gmra.mxu0 %v827
        %v1299 = vpop.f32.mrf.mxu0
        %v1300 = vadd.f32 %v1225, %v1299
        %1301 = vmatmul.f32.gmra.mxu0 %v829
        %v1302 = vpop.f32.mrf.mxu0
        %v1303 = vadd.f32 %v1228, %v1302
        %1304 = vdwg.mxu0
        %1305 = vmatpush.msra.mxu0 0.0
        %1306 = vmatpush.msra.mxu0 0.0
        %1307 = vmatpush.msra.mxu0 0.0
        %1308 = vmatpush.msra.mxu0 0.0
        %1309 = vmatpush.msra.mxu0 0.0
        %1310 = vmatpush.msra.mxu0 0.0
        %1311 = vmatpush.msra.mxu0 0.0
        %1312 = vmatpush.msra.mxu0 %v1080
        %1313 = vmatpush.msra.mxu0 %v1078
        %1314 = vmatpush.msra.mxu0 %v1076
        %1315 = vmatpush.msra.mxu0 %v1074
        %1316 = vmatpush.msra.mxu0 %v1072
        %1317 = vmatpush.msra.mxu0 %v1070
        %1318 = vmatpush.msra.mxu0 %v1068
        %1319 = vmatpush.msra.mxu0 %v1066
        %1320 = vmatpush.msra.mxu0 %v1064
        %1321 = vmatmul.f32.gmra.mxu0 %v1231
        %v1322 = vpop.f32.mrf.mxu0
        %v1323 = vadd.f32 %v1300, %v1322
        %1324 = vmatmul.f32.gmra.mxu0 %v1234
        %v1325 = vpop.f32.mrf.mxu0
        %v1326 = vadd.f32 %v1303, %v1325
        %1327 = vdwg.mxu0
        %v1328 = vld [vmem:[#allocation9 + $0x320] sm:$0xff]
        %v1329 = vld [vmem:[#allocation9 + $0x328] sm:$0xff]
        %v1330 = vld [vmem:[#allocation9 + $0x330] sm:$0xff]
        %v1331 = vld [vmem:[#allocation9 + $0x338] sm:$0xff]
        %v1332 = vld [vmem:[#allocation9 + $0x340] sm:$0xff]
        %v1333 = vld [vmem:[#allocation9 + $0x348] sm:$0xff]
        %v1334 = vld [vmem:[#allocation9 + $0x350] sm:$0xff]
        %v1335 = vld [vmem:[#allocation9 + $0x358] sm:$0xff]
        %v1336 = vld [vmem:[#allocation9 + $0x360] sm:$0xff]
        %v1337 = vld [vmem:[#allocation9 + $0x368] sm:$0xff]
        %v1338 = vld [vmem:[#allocation9 + $0x370] sm:$0xff]
        %v1339 = vld [vmem:[#allocation9 + $0x378] sm:$0xff]
        %v1340 = vld [vmem:[#allocation9 + $0x380] sm:$0xff]
        %v1341 = vld [vmem:[#allocation9 + $0x388] sm:$0xff]
        %v1342 = vld [vmem:[#allocation9 + $0x390] sm:$0xff]
        %v1343 = vld [vmem:[#allocation9 + $0x398] sm:$0xff]
        %v1344 = vld [vmem:[#allocation9 + $0x3a0] sm:$0xff]
        %v1345 = vld [vmem:[#allocation9 + $0x3a8] sm:$0xff]
        %v1346 = vld [vmem:[#allocation9 + $0x3b0] sm:$0xff]
        %v1347 = vld [vmem:[#allocation9 + $0x3b8] sm:$0xff]
        %v1348 = vld [vmem:[#allocation9 + $0x3c0] sm:$0xff]
        %v1349 = vld [vmem:[#allocation9 + $0x3c8] sm:$0xff]
        %v1350 = vld [vmem:[#allocation9 + $0x3d0] sm:$0xff]
        %v1351 = vld [vmem:[#allocation9 + $0x3d8] sm:$0xff]
        %v1352 = vld [vmem:[#allocation9 + $0x3e0] sm:$0xff]
        %v1353 = vld [vmem:[#allocation9 + $0x3e8] sm:$0xff]
        %v1354 = vld [vmem:[#allocation9 + $0x3f0] sm:$0xff]
        %v1355 = vld [vmem:[#allocation9 + $0x3f8] sm:$0xff]
        %v1356 = vld [vmem:[#allocation9 + $0x400] sm:$0xff]
        %v1357 = vld [vmem:[#allocation9 + $0x408] sm:$0xff]
        %v1358 = vld [vmem:[#allocation9 + $0x410] sm:$0xff]
        %v1359 = vld [vmem:[#allocation9 + $0x418] sm:$0xff]
        %v1360 = vld [vmem:[#allocation9 + $0x420] sm:$0xff]
        %v1361 = vld [vmem:[#allocation9 + $0x428] sm:$0xff]
        %v1362 = vld [vmem:[#allocation9 + $0x430] sm:$0xff]
        %v1363 = vld [vmem:[#allocation9 + $0x438] sm:$0xff]
        %v1364 = vld [vmem:[#allocation9 + $0x440] sm:$0xff]
        %v1365 = vld [vmem:[#allocation9 + $0x448] sm:$0xff]
        %v1366 = vld [vmem:[#allocation9 + $0x450] sm:$0xff]
        %v1367 = vld [vmem:[#allocation9 + $0x458] sm:$0xff]
        %v1368 = vld [vmem:[#allocation9 + $0x460] sm:$0xff]
        %v1369 = vld [vmem:[#allocation9 + $0x468] sm:$0xff]
        %v1370 = vld [vmem:[#allocation9 + $0x470] sm:$0xff]
        %v1371 = vld [vmem:[#allocation9 + $0x478] sm:$0xff]
        %v1372 = vld [vmem:[#allocation9 + $0x480] sm:$0xff]
        %v1373 = vld [vmem:[#allocation9 + $0x488] sm:$0xff]
        %v1374 = vld [vmem:[#allocation9 + $0x490] sm:$0xff]
        %v1375 = vld [vmem:[#allocation9 + $0x498] sm:$0xff]
        %v1376 = vld [vmem:[#allocation9 + $0x4a0] sm:$0xff]
        %v1377 = vld [vmem:[#allocation9 + $0x4a8] sm:$0xff]
        %v1379 = vsel %vm1131, %v1028, 0
        %v1382 = vsel %vm1131, %v1030, 0
        %1384 = vmatpush.msra.mxu0 %v1358
        %1385 = vmatpush.msra.mxu0 %v1356
        %1386 = vmatpush.msra.mxu0 %v1354
        %1387 = vmatpush.msra.mxu0 %v1352
        %1388 = vmatpush.msra.mxu0 %v1350
        %1389 = vmatpush.msra.mxu0 %v1348
        %1390 = vmatpush.msra.mxu0 %v1346
        %1391 = vmatpush.msra.mxu0 %v1344
        %1392 = vmatpush.msra.mxu0 %v1342
        %1393 = vmatpush.msra.mxu0 %v1340
        %1394 = vmatpush.msra.mxu0 %v1338
        %1395 = vmatpush.msra.mxu0 %v1336
        %1396 = vmatpush.msra.mxu0 %v1334
        %1397 = vmatpush.msra.mxu0 %v1332
        %1398 = vmatpush.msra.mxu0 %v1330
        %1399 = vmatpush.msra.mxu0 %v1328
        %1400 = vmatmul.f32.gmra.mxu0 %v1027
        %v1401 = vpop.f32.mrf.mxu0
        %v1402 = vadd.f32 0.0, %v1401
        %1403 = vmatmul.f32.gmra.mxu0 %v1029
        %v1404 = vpop.f32.mrf.mxu0
        %v1405 = vadd.f32 0.0, %v1404
        %1406 = vdwg.mxu0
        %1407 = vmatpush.msra.mxu0 0.0
        %1408 = vmatpush.msra.mxu0 0.0
        %1409 = vmatpush.msra.mxu0 0.0
        %1410 = vmatpush.msra.mxu0 0.0
        %1411 = vmatpush.msra.mxu0 0.0
        %1412 = vmatpush.msra.mxu0 0.0
        %1413 = vmatpush.msra.mxu0 0.0
        %1414 = vmatpush.msra.mxu0 %v1376
        %1415 = vmatpush.msra.mxu0 %v1374
        %1416 = vmatpush.msra.mxu0 %v1372
        %1417 = vmatpush.msra.mxu0 %v1370
        %1418 = vmatpush.msra.mxu0 %v1368
        %1419 = vmatpush.msra.mxu0 %v1366
        %1420 = vmatpush.msra.mxu0 %v1364
        %1421 = vmatpush.msra.mxu0 %v1362
        %1422 = vmatpush.msra.mxu0 %v1360
        %1423 = vmatmul.f32.gmra.mxu0 %v1379
        %v1424 = vpop.f32.mrf.mxu0
        %v1425 = vadd.f32 %v1402, %v1424
        %1426 = vmatmul.f32.gmra.mxu0 %v1382
        %v1427 = vpop.f32.mrf.mxu0
        %v1428 = vadd.f32 %v1405, %v1427
        %1429 = vdwg.mxu0
        %1430 = vmatpush.msra.mxu0 %v1359
        %1431 = vmatpush.msra.mxu0 %v1357
        %1432 = vmatpush.msra.mxu0 %v1355
        %1433 = vmatpush.msra.mxu0 %v1353
        %1434 = vmatpush.msra.mxu0 %v1351
        %1435 = vmatpush.msra.mxu0 %v1349
        %1436 = vmatpush.msra.mxu0 %v1347
        %1437 = vmatpush.msra.mxu0 %v1345
        %1438 = vmatpush.msra.mxu0 %v1343
        %1439 = vmatpush.msra.mxu0 %v1341
        %1440 = vmatpush.msra.mxu0 %v1339
        %1441 = vmatpush.msra.mxu0 %v1337
        %1442 = vmatpush.msra.mxu0 %v1335
        %1443 = vmatpush.msra.mxu0 %v1333
        %1444 = vmatpush.msra.mxu0 %v1331
        %1445 = vmatpush.msra.mxu0 %v1329
        %1446 = vmatmul.f32.gmra.mxu0 %v1027
        %v1447 = vpop.f32.mrf.mxu0
        %v1448 = vadd.f32 0.0, %v1447
        %1449 = vmatmul.f32.gmra.mxu0 %v1029
        %v1450 = vpop.f32.mrf.mxu0
        %v1451 = vadd.f32 0.0, %v1450
        %1452 = vdwg.mxu0
        %1453 = vmatpush.msra.mxu0 0.0
        %1454 = vmatpush.msra.mxu0 0.0
        %1455 = vmatpush.msra.mxu0 0.0
        %1456 = vmatpush.msra.mxu0 0.0
        %1457 = vmatpush.msra.mxu0 0.0
        %1458 = vmatpush.msra.mxu0 0.0
        %1459 = vmatpush.msra.mxu0 0.0
        %1460 = vmatpush.msra.mxu0 %v1377
        %1461 = vmatpush.msra.mxu0 %v1375
        %1462 = vmatpush.msra.mxu0 %v1373
        %1463 = vmatpush.msra.mxu0 %v1371
        %1464 = vmatpush.msra.mxu0 %v1369
        %1465 = vmatpush.msra.mxu0 %v1367
        %1466 = vmatpush.msra.mxu0 %v1365
        %1467 = vmatpush.msra.mxu0 %v1363
        %1468 = vmatpush.msra.mxu0 %v1361
        %1469 = vmatmul.f32.gmra.mxu0 %v1379
        %v1470 = vpop.f32.mrf.mxu0
        %v1471 = vadd.f32 %v1448, %v1470
        %1472 = vmatmul.f32.gmra.mxu0 %v1382
        %v1473 = vpop.f32.mrf.mxu0
        %v1474 = vadd.f32 %v1451, %v1473
        %1475 = vdwg.mxu0
        %v1476 = vadd.f32 %v1277, %v1425
        %v1477 = vadd.f32 %v1323, %v1471
        %v1478 = vadd.f32 %v1280, %v1428
        %v1479 = vadd.f32 %v1326, %v1474
        %v1480 = vld [vmem:[%s5] sm:$0x3]
        %v1482 = vperm.slane %v1480, 0
        %v1483 = vperm.slane %v1480, 1
        %v1486 = vadd.f32 %v1476, %v1482
        %v1487 = vadd.f32 %v1477, %v1483
        %v1488 = vadd.f32 %v1478, %v1482
        %v1489 = vadd.f32 %v1479, %v1483
        %v1490 = vmax.f32 %v1486, 0.0
        %v1491 = vmax.f32 %v1487, 0.0
        %v1492 = vmax.f32 %v1488, 0.0
        %v1493 = vmax.f32 %v1489, 0.0
        %v1494 = vld [vmem:[%s6] sm:$0xff]
        %v1495 = vld [vmem:[%s6 + $0x8] sm:$0xff]
        %v1496 = vld [vmem:[%s6 + $0x10] sm:$0xff]
        %v1497 = vld [vmem:[%s6 + $0x18] sm:$0xff]
        %v1498 = vld [vmem:[%s6 + $0x20] sm:$0xff]
        %v1499 = vld [vmem:[%s6 + $0x28] sm:$0xff]
        %v1500 = vld [vmem:[%s6 + $0x30] sm:$0xff]
        %v1501 = vld [vmem:[%s6 + $0x38] sm:$0xff]
        %v1502 = vld [vmem:[%s6 + $0x40] sm:$0xff]
        %v1503 = vld [vmem:[%s6 + $0x48] sm:$0xff]
        %v1504 = vld [vmem:[%s6 + $0x50] sm:$0xff]
        %v1505 = vld [vmem:[%s6 + $0x58] sm:$0xff]
        %v1506 = vld [vmem:[%s6 + $0x60] sm:$0xff]
        %v1507 = vld [vmem:[%s6 + $0x68] sm:$0xff]
        %v1508 = vld [vmem:[%s6 + $0x70] sm:$0xff]
        %v1509 = vld [vmem:[%s6 + $0x78] sm:$0xff]
        %v1510 = vld [vmem:[%s6 + $0x80] sm:$0xff]
        %v1511 = vld [vmem:[%s6 + $0x88] sm:$0xff]
        %v1512 = vld [vmem:[%s6 + $0x90] sm:$0xff]
        %v1513 = vld [vmem:[%s6 + $0x98] sm:$0xff]
        %v1514 = vld [vmem:[%s6 + $0xa0] sm:$0xff]
        %v1515 = vld [vmem:[%s6 + $0xa8] sm:$0xff]
        %v1516 = vld [vmem:[%s6 + $0xb0] sm:$0xff]
        %v1517 = vld [vmem:[%s6 + $0xb8] sm:$0xff]
        %v1518 = vld [vmem:[%s6 + $0xc0] sm:$0xff]
        %v1519 = vld [vmem:[%s6 + $0xc8] sm:$0xff]
        %v1520 = vld [vmem:[%s6 + $0xd0] sm:$0xff]
        %v1521 = vld [vmem:[%s6 + $0xd8] sm:$0xff]
        %v1522 = vld [vmem:[%s6 + $0xe0] sm:$0xff]
        %v1523 = vld [vmem:[%s6 + $0xe8] sm:$0xff]
        %v1524 = vld [vmem:[%s6 + $0xf0] sm:$0xff]
        %v1525 = vld [vmem:[%s6 + $0xf8] sm:$0xff]
        %v1526 = vld [vmem:[%s7] sm:$0x1]
        %v1528 = vperm.slane %v1526, 0
        %1530 = vmatpush.msra.mxu0 %v1509
        %1531 = vmatpush.msra.mxu0 %v1508
        %1532 = vmatpush.msra.mxu0 %v1507
        %1533 = vmatpush.msra.mxu0 %v1506
        %1534 = vmatpush.msra.mxu0 %v1505
        %1535 = vmatpush.msra.mxu0 %v1504
        %1536 = vmatpush.msra.mxu0 %v1503
        %1537 = vmatpush.msra.mxu0 %v1502
        %1538 = vmatpush.msra.mxu0 %v1501
        %1539 = vmatpush.msra.mxu0 %v1500
        %1540 = vmatpush.msra.mxu0 %v1499
        %1541 = vmatpush.msra.mxu0 %v1498
        %1542 = vmatpush.msra.mxu0 %v1497
        %1543 = vmatpush.msra.mxu0 %v1496
        %1544 = vmatpush.msra.mxu0 %v1495
        %1545 = vmatpush.msra.mxu0 %v1494
        %1546 = vmatmul.f32.gmra.mxu0 %v1490
        %v1547 = vpop.f32.mrf.mxu0
        %v1548 = vadd.f32 %v1528, %v1547
        %1549 = vmatmul.f32.gmra.mxu0 %v1492
        %v1550 = vpop.f32.mrf.mxu0
        %v1551 = vadd.f32 %v1528, %v1550
        %1552 = vdwg.mxu0
        %1553 = vmatpush.msra.mxu0 %v1525
        %1554 = vmatpush.msra.mxu0 %v1524
        %1555 = vmatpush.msra.mxu0 %v1523
        %1556 = vmatpush.msra.mxu0 %v1522
        %1557 = vmatpush.msra.mxu0 %v1521
        %1558 = vmatpush.msra.mxu0 %v1520
        %1559 = vmatpush.msra.mxu0 %v1519
        %1560 = vmatpush.msra.mxu0 %v1518
        %1561 = vmatpush.msra.mxu0 %v1517
        %1562 = vmatpush.msra.mxu0 %v1516
        %1563 = vmatpush.msra.mxu0 %v1515
        %1564 = vmatpush.msra.mxu0 %v1514
        %1565 = vmatpush.msra.mxu0 %v1513
        %1566 = vmatpush.msra.mxu0 %v1512
        %1567 = vmatpush.msra.mxu0 %v1511
        %1568 = vmatpush.msra.mxu0 %v1510
        %1569 = vmatmul.f32.gmra.mxu0 %v1491
        %v1570 = vpop.f32.mrf.mxu0
        %v1571 = vadd.f32 %v1548, %v1570
        %1572 = vmatmul.f32.gmra.mxu0 %v1493
        %v1573 = vpop.f32.mrf.mxu0
        %v1574 = vadd.f32 %v1551, %v1573
        %1575 = vdwg.mxu0
        %v1576 = vmax.f32 %v1571, 0.0
        %v1577 = vmax.f32 %v1574, 0.0
        %v1578 = vld [vmem:[%s8] sm:$0xff]
        %v1579 = vld [vmem:[%s8 + $0x8] sm:$0xff]
        %v1580 = vld [vmem:[%s8 + $0x10] sm:$0xff]
        %v1581 = vld [vmem:[%s8 + $0x18] sm:$0xff]
        %v1582 = vld [vmem:[%s8 + $0x20] sm:$0xff]
        %v1583 = vld [vmem:[%s8 + $0x28] sm:$0xff]
        %v1584 = vld [vmem:[%s8 + $0x30] sm:$0xff]
        %v1585 = vld [vmem:[%s8 + $0x38] sm:$0xff]
        %v1586 = vld [vmem:[%s9] sm:$0x1]
        %v1588 = vperm.slane %v1586, 0
        %vm1590 = vcmask 523264
        %v1592 = vsel %vm1590, %v1576, 0
        %v1595 = vsel %vm1590, %v1577, 0
        %1597 = vmatpush.msra.mxu0 0.0
        %1598 = vmatpush.msra.mxu0 0.0
        %1599 = vmatpush.msra.mxu0 0.0
        %1600 = vmatpush.msra.mxu0 0.0
        %1601 = vmatpush.msra.mxu0 0.0
        %1602 = vmatpush.msra.mxu0 0.0
        %1603 = vmatpush.msra.mxu0 0.0
        %1604 = vmatpush.msra.mxu0 0.0
        %1605 = vmatpush.msra.mxu0 %v1585
        %1606 = vmatpush.msra.mxu0 %v1584
        %1607 = vmatpush.msra.mxu0 %v1583
        %1608 = vmatpush.msra.mxu0 %v1582
        %1609 = vmatpush.msra.mxu0 %v1581
        %1610 = vmatpush.msra.mxu0 %v1580
        %1611 = vmatpush.msra.mxu0 %v1579
        %1612 = vmatpush.msra.mxu0 %v1578
        %1613 = vmatmul.f32.gmra.mxu0 %v1592
        %v1614 = vpop.f32.mrf.mxu0
        %v1615 = vadd.f32 %v1588, %v1614
        %1616 = vmatmul.f32.gmra.mxu0 %v1595
        %v1617 = vpop.f32.mrf.mxu0
        %v1618 = vadd.f32 %v1588, %v1617
        %1619 = vdwg.mxu0
        %v1620 = vmax.f32 %v1615, 0.0
        %v1621 = vmax.f32 %v1618, 0.0
        %v1622 = vld [vmem:[%s10] sm:$0xff]
        %v1623 = vld [vmem:[#allocation2] sm:$0x1]
        %v1625 = vperm.slane %v1623, 0
        %vm1627 = vcmask 64512
        %v1629 = vsel %vm1627, %v1620, 0
        %v1632 = vsel %vm1627, %v1621, 0
        %1634 = vmatpush.msra.mxu0 0.0
        %1635 = vmatpush.msra.mxu0 0.0
        %1636 = vmatpush.msra.mxu0 0.0
        %1637 = vmatpush.msra.mxu0 0.0
        %1638 = vmatpush.msra.mxu0 0.0
        %1639 = vmatpush.msra.mxu0 0.0
        %1640 = vmatpush.msra.mxu0 0.0
        %1641 = vmatpush.msra.mxu0 0.0
        %1642 = vmatpush.msra.mxu0 0.0
        %1643 = vmatpush.msra.mxu0 0.0
        %1644 = vmatpush.msra.mxu0 0.0
        %1645 = vmatpush.msra.mxu0 0.0
        %1646 = vmatpush.msra.mxu0 0.0
        %1647 = vmatpush.msra.mxu0 0.0
        %1648 = vmatpush.msra.mxu0 0.0
        %1649 = vmatpush.msra.mxu0 %v1622
        %1650 = vmatmul.f32.gmra.mxu0 %v1629
        %v1651 = vpop.f32.mrf.mxu0
        %v1652 = vadd.f32 %v1625, %v1651
        %1653 = vmatmul.f32.gmra.mxu0 %v1632
        %v1654 = vpop.f32.mrf.mxu0
        %v1655 = vadd.f32 %v1625, %v1654
        %1656 = vdwg.mxu0
        %v1657 = vmax.f32 %v1652, 0.0
        %v1658 = vmax.f32 %v1655, 0.0
        %v1659 = vsub.f32 0.0, %v1657
        %v1660 = vsub.f32 0.0, %v1658
        %v1661 = vmul.f32 %v1659, 1.442695
        %v1662 = vpow.pop %v1661
        %v1663 = vmul.f32 %v1660, 1.442695
        %v1664 = vpow.pop %v1663
        %v1665 = vadd.f32 %v1662, 1.0
        %v1666 = vadd.f32 %v1664, 1.0
        %v1667 = vrcp.pop %v1665
        %v1668 = vmul.f32 %v1665, %v1667
        %v1669 = vsub.f32 1.0, %v1668
        %v1670 = vmul.f32 %v1667, %v1669
        %v1671 = vadd.f32 %v1667, %v1670
        %vm1672 = vweird.f32 %v1665
        %vm1673 = vweird.f32 %v1667
        %vm1674 = vmor %vm1672, %vm1673
        %v1675 = vsel %vm1674, %v1667, %v1671
        %v1676 = vand.u32 2147483647, %v1665
        %vm1677 = vcmp.eq.f32.partialorder %v1676, 8.507059e+37
        %v1678 = vand.u32 %v1665, 2147483648
        %v1679 = vor.u32 1.1754944e-38, %v1678
        %v1680 = vsel %vm1677, %v1679, %v1675
        %v1681 = vmul.f32 1.0, %v1680
        %v1682 = vrcp.pop %v1666
        %v1683 = vmul.f32 %v1666, %v1682
        %v1684 = vsub.f32 1.0, %v1683
        %v1685 = vmul.f32 %v1682, %v1684
        %v1686 = vadd.f32 %v1682, %v1685
        %vm1687 = vweird.f32 %v1666
        %vm1688 = vweird.f32 %v1682
        %vm1689 = vmor %vm1687, %vm1688
        %v1690 = vsel %vm1689, %v1682, %v1686
        %v1691 = vand.u32 2147483647, %v1666
        %vm1692 = vcmp.eq.f32.partialorder %v1691, 8.507059e+37
        %v1693 = vand.u32 %v1666, 2147483648
        %v1694 = vor.u32 1.1754944e-38, %v1693
        %v1695 = vsel %vm1692, %v1694, %v1690
        %v1696 = vmul.f32 1.0, %v1695
        %vm1697 = vcmask 7168
        %1698 = vst.msk [vmem:[%s715] sm:$0xff] %vm1697, %v1681
        %1699 = vst.msk [vmem:[%s715 + $0x8] sm:$0xff] %vm1697, %v1696
        %s1700 = smul.u32 2, %s30
        %p1701 = scmp.lt.s32.totalorder %s1700, 3
        %s1702 = scalar_select %p1701, %s1700, 3
        %s1703 = smul.addr %s1702, 8
        %s1704 = scalar_lea.vmem %s12, %s1703
        // Predicated region
        $region157: #{tpu_custom_call.1} parent=135 // pred_check
          %p1705 = pneg %p315
        $region158: #{tpu_custom_call.1} parent=135 // pred_check_branch
          %1707 = sbr.rel (%p1705) target = $region160
        $region159: #{tpu_custom_call.1} parent=135 // pred_region
          %s1708 = smul.u32 2, %s30
        $region160: #{tpu_custom_call.1} parent=135 // pred_fallthru
          _
      $region136: #{tpu_custom_call.1} parent=5 // pred_fallthru
        _
      %p1709 = scmp.le.s32.totalorder 2, %s25
      // Predicated region
      $region161: #{tpu_custom_call.1} parent=5 // pred_check
        %p1710 = pneg %p1709
      $region162: #{tpu_custom_call.1} parent=5 // pred_check_branch
        %1712 = sbr.rel (%p1710) target = $region164
      $region163: #{tpu_custom_call.1} parent=5 // pred_region
        %s1713 = ssub.s32 %s25, 2
        // Predicated region
        $region165: #{tpu_custom_call.1} parent=163 // pred_check
          %p1714 = pneg %p321
        $region166: #{tpu_custom_call.1} parent=163 // pred_check_branch
          %1716 = sbr.rel (%p1714) target = $region168
        $region167: #{tpu_custom_call.1} parent=163 // pred_region
          %s1717 = smul.u32 2, %s31
          %p1718 = scmp.lt.s32.totalorder %s1717, 3
          %s1719 = scalar_select %p1718, %s1717, 3
          %s1720 = smul.addr %s1719, 8
          %s1721 = scalar_lea.vmem %s12, %s1720
        $region168: #{tpu_custom_call.1} parent=163 // pred_fallthru
          _
      $region164: #{tpu_custom_call.1} parent=5 // pred_fallthru
        _
    $region6: #{tpu_custom_call.1} parent=1 // loop_footer
      %s29 = sadd.s32 1, %s25
    $region7: #{tpu_custom_call.1} parent=1 // loop_footer_branch
      %24 = sbr.rel target = $region3
    $region8: #{tpu_custom_call.1} parent=1 // loop_exit
      _
    %1722 = vsyncpa [#allocation4], 1
    %s1723 = scalar_lea.sflag [#allocation4], 1
    %1724 = vsyncpa %s1723, 1
    %1725 = vsyncpa [#allocation10], 1
    %1726 = vsyncpa [#allocation5], 1
    %s1727 = scalar_lea.sflag [#allocation5], 1
    %1728 = vsyncpa %s1727, 1

</llo_original>
